<compile_context>
chip_gen: v7x
topology: tpu7x:2x2x1
jax: 0.10.0
libtpu: 0.0.40
codegen_flags: <defaults>
</compile_context>

<pallas_src>
import math
from functools import partial

import jax
import jax.numpy as jnp
from jax import lax
from jax.experimental import pallas as pl
from jax.experimental.pallas import tpu as pltpu


def _mha_kernel(xq_ref, xk_ref, xv_ref,
                wq_ref, wk_ref, wv_ref,
                bq_ref, bk_ref, bv_ref,
                wo_ref, bo_ref,
                out_ref,
                ctx_ref,
                *, num_heads):
    """Fused multi-head attention for one batch element.

    Shapes seen by the kernel (batch dim squeezed away by BlockSpec):
      xq/xk/xv_ref : (S, D)  f32 activations
      wq/wk/wv_ref : (D, D)  bf16 projection weights (wq pre-scaled by 1/sqrt(d_k))
      bq/bk/bv_ref : (1, D)  f32 biases (bq pre-scaled by 1/sqrt(d_k))
      wo_ref       : (D, D)  bf16 output-projection weight
      bo_ref       : (1, D)  f32 output-projection bias
      out_ref      : (S, D)
      ctx_ref      : (S, D)  f32 VMEM scratch holding the concatenated heads
    """
    D = out_ref.shape[-1]
    d_k = D // num_heads

    # Lane-dense QKV projections: bf16 operands, f32 accumulation on the MXU,
    # f32 bias add, then one cast back to bf16 for the attention matmuls.
    def project(x_ref, w_ref, b_ref):
        y = jnp.dot(x_ref[...].astype(jnp.bfloat16), w_ref[...],
                    preferred_element_type=jnp.float32) + b_ref[...]
        return y.astype(jnp.bfloat16)

    q_all = project(xq_ref, wq_ref, bq_ref)   # (S, D), already scaled by 1/sqrt(d_k)
    k_all = project(xk_ref, wk_ref, bk_ref)
    v_all = project(xv_ref, wv_ref, bv_ref)

    # Per-head attention. Static loop + static lane-slice offsets (keeps the
    # fused projections lane-dense); each head's temporaries die into ctx_ref.
    for h in range(num_heads):
        sl = slice(h * d_k, (h + 1) * d_k)
        q = q_all[:, sl]                       # (S, d_k) bf16
        k = k_all[:, sl]
        v = v_all[:, sl]

        # scores = (q / sqrt(d_k)) @ k^T  — scale was folded into wq/bq.
        scores = lax.dot_general(q, k, (((1,), (1,)), ((), ())),
                                 preferred_element_type=jnp.float32)   # (S,S) f32

        # Numerically stable softmax with deferred normalization:
        #   ctx = (e @ v) * 1/sum(e)   instead of   (e / sum(e)) @ v
        m = jnp.max(scores, axis=-1, keepdims=True)
        e = jnp.exp(scores - m)
        l = jnp.sum(e, axis=-1, keepdims=True)
        ctx_un = jnp.dot(e.astype(jnp.bfloat16), v,
                         preferred_element_type=jnp.float32)           # (S, d_k)
        ctx_ref[:, sl] = ctx_un * pl.reciprocal(l, approx=True)

    # Single lane-dense output projection (K = N = D) + bias.
    out = jnp.dot(ctx_ref[...].astype(jnp.bfloat16), wo_ref[...],
                  preferred_element_type=jnp.float32) + bo_ref[...]
    out_ref[...] = out.astype(out_ref.dtype)


def multi_headed_attention(xq, xk, xv, wq, bq, wk, bk, wv, bv, wo, bo, *, num_heads):
    """q/k/v: (B, S, D) f32.  w*: (D, D) in (in,out) layout, b*: (D,).  Returns (B, S, D)."""
    B, S, D = xq.shape
    assert D % num_heads == 0
    d_k = D // num_heads
    scale = 1.0 / math.sqrt(d_k)

    # One-time parameter plumbing (outside the hot path):
    #  * fold 1/sqrt(d_k) into the query projection,
    #  * store matmul weights in bf16 (kernel accumulates in f32),
    #  * keep biases in f32 (added after the f32-accumulated matmul).
    wq_bf = (wq * scale).astype(jnp.bfloat16)
    wk_bf = wk.astype(jnp.bfloat16)
    wv_bf = wv.astype(jnp.bfloat16)
    wo_bf = wo.astype(jnp.bfloat16)
    bq_2d = (bq * scale).reshape(1, D).astype(jnp.float32)
    bk_2d = bk.reshape(1, D).astype(jnp.float32)
    bv_2d = bv.reshape(1, D).astype(jnp.float32)
    bo_2d = bo.reshape(1, D).astype(jnp.float32)

    act_spec = pl.BlockSpec((pl.Squeezed(), S, D), lambda b: (b, 0, 0))
    w_spec = pl.BlockSpec((D, D), lambda b: (0, 0))      # constant index map: fetched once
    b_spec = pl.BlockSpec((1, D), lambda b: (0, 0))

    return pl.pallas_call(
        partial(_mha_kernel, num_heads=num_heads),
        out_shape=jax.ShapeDtypeStruct((B, S, D), xq.dtype),
        grid=(B,),
        in_specs=[act_spec, act_spec, act_spec,
                  w_spec, w_spec, w_spec,
                  b_spec, b_spec, b_spec,
                  w_spec, b_spec],
        out_specs=pl.BlockSpec((pl.Squeezed(), S, D), lambda b: (b, 0, 0)),
        scratch_shapes=[pltpu.VMEM((S, D), jnp.float32)],
        compiler_params=pltpu.CompilerParams(
            dimension_semantics=("parallel",),
            # 48 MiB: above the v5e/v6e defaults (16/32 MiB) so BERT-scale
            # weights+activations fit, and still below v7x's 64 MiB physical.
            vmem_limit_bytes=48 * 1024 * 1024),
    )(xq, xk, xv, wq_bf, wk_bf, wv_bf, bq_2d, bk_2d, bv_2d, wo_bf, bo_2d)


def _reference(xq, xk, xv, wq, bq, wk, bk, wv, bv, wo, bo, num_heads):
    B, S, D = xq.shape
    d_k = D // num_heads
    hp = lax.Precision.HIGHEST

    def proj(x, w, b):
        y = jnp.einsum('bsd,de->bse', x, w, precision=hp) + b
        return y.reshape(B, S, num_heads, d_k).transpose(0, 2, 1, 3)

    q, k, v = proj(xq, wq, bq), proj(xk, wk, bk), proj(xv, wv, bv)
    scores = jnp.einsum('bhqd,bhkd->bhqk', q, k, precision=hp) / math.sqrt(d_k)
    p = jax.nn.softmax(scores, axis=-1)
    ctx = jnp.einsum('bhqk,bhkd->bhqd', p, v, precision=hp)
    ctx = ctx.transpose(0, 2, 1, 3).reshape(B, S, D)
    return jnp.einsum('bsd,de->bse', ctx, wo, precision=hp) + bo


if __name__ == "__main__":
    key = jax.random.PRNGKey(0)
    keys = jax.random.split(key, 11)

    batch, seq, d_model, num_heads = 4, 8, 32, 4

    # Deterministic synthetic activations (query, key, value).
    xq = jax.random.normal(keys[0], (batch, seq, d_model), dtype=jnp.float32)
    xk = jax.random.normal(keys[1], (batch, seq, d_model), dtype=jnp.float32)
    xv = jax.random.normal(keys[2], (batch, seq, d_model), dtype=jnp.float32)

    # nn.Linear-style init: U(-1/sqrt(D), 1/sqrt(D)).
    bound = 1.0 / math.sqrt(d_model)
    def u(k, shape):
        return jax.random.uniform(k, shape, jnp.float32, -bound, bound)

    wq, bq = u(keys[3], (d_model, d_model)), u(keys[4], (d_model,))
    wk, bk = u(keys[5], (d_model, d_model)), u(keys[6], (d_model,))
    wv, bv = u(keys[7], (d_model, d_model)), u(keys[8], (d_model,))
    wo, bo = u(keys[9], (d_model, d_model)), u(keys[10], (d_model,))

    out = multi_headed_attention(xq, xk, xv, wq, bq, wk, bk, wv, bv, wo, bo,
                                 num_heads=num_heads)
    out = jax.block_until_ready(out)

    ref = _reference(xq, xk, xv, wq, bq, wk, bk, wv, bv, wo, bo, num_heads)
    assert out.shape == (batch, seq, d_model)
    # Tolerance loosened vs the f32/HIGHEST reference because the kernel uses
    # bf16 matmul operands (f32 accumulation) per the performance review.
    assert jnp.allclose(out, ref, atol=2e-2, rtol=2e-2)

    print("KERNEL_OK")
</pallas_src>

<mosaic_0001>
module attributes {stable_mosaic.version = 11 : i64} {
  func.func @_mha_kernel(%arg0: i32, %arg1: memref<1x8x32xf32, #tpu.memory_space<vmem>>, %arg2: memref<1x8x32xf32, #tpu.memory_space<vmem>>, %arg3: memref<1x8x32xf32, #tpu.memory_space<vmem>>, %arg4: memref<32x32xbf16, #tpu.memory_space<vmem>>, %arg5: memref<32x32xbf16, #tpu.memory_space<vmem>>, %arg6: memref<32x32xbf16, #tpu.memory_space<vmem>>, %arg7: memref<1x32xf32, #tpu.memory_space<vmem>>, %arg8: memref<1x32xf32, #tpu.memory_space<vmem>>, %arg9: memref<1x32xf32, #tpu.memory_space<vmem>>, %arg10: memref<32x32xbf16, #tpu.memory_space<vmem>>, %arg11: memref<1x32xf32, #tpu.memory_space<vmem>>, %arg12: memref<1x8x32xf32, #tpu.memory_space<vmem>>, %arg13: memref<8x32xf32, #tpu.memory_space<vmem>>) attributes {dimension_semantics = [#tpu.dimension_semantics<parallel>], iteration_bounds = array<i64: 4>, scalar_prefetch = 0 : i64, scratch_operands = 1 : i64, tpu.core_type = #tpu.core_type<tc>, window_params = [{transform_indices = @transform_0, window_bounds = array<i64: 1, 8, 32>}, {transform_indices = @transform_1, window_bounds = array<i64: 1, 8, 32>}, {transform_indices = @transform_2, window_bounds = array<i64: 1, 8, 32>}, {pipeline_mode = #tpu.pipeline_mode<synchronous>, transform_indices = @transform_3, window_bounds = array<i64: 32, 32>}, {pipeline_mode = #tpu.pipeline_mode<synchronous>, transform_indices = @transform_4, window_bounds = array<i64: 32, 32>}, {pipeline_mode = #tpu.pipeline_mode<synchronous>, transform_indices = @transform_5, window_bounds = array<i64: 32, 32>}, {pipeline_mode = #tpu.pipeline_mode<synchronous>, transform_indices = @transform_6, window_bounds = array<i64: 1, 32>}, {pipeline_mode = #tpu.pipeline_mode<synchronous>, transform_indices = @transform_7, window_bounds = array<i64: 1, 32>}, {pipeline_mode = #tpu.pipeline_mode<synchronous>, transform_indices = @transform_8, window_bounds = array<i64: 1, 32>}, {pipeline_mode = #tpu.pipeline_mode<synchronous>, transform_indices = @transform_9, window_bounds = array<i64: 32, 32>}, {pipeline_mode = #tpu.pipeline_mode<synchronous>, transform_indices = @transform_10, window_bounds = array<i64: 1, 32>}, {transform_indices = @transform_11, window_bounds = array<i64: 1, 8, 32>}]} {
    %c0 = arith.constant 0 : index
    %c0_0 = arith.constant 0 : index
    %c0_1 = arith.constant 0 : index
    %0 = vector.load %arg1[%c0, %c0_0, %c0_1] : memref<1x8x32xf32, #tpu.memory_space<vmem>>, vector<1x8x32xf32>
    %1 = vector.shape_cast %0 : vector<1x8x32xf32> to vector<8x32xf32>
    %2 = arith.truncf %1 : vector<8x32xf32> to vector<8x32xbf16>
    %c0_2 = arith.constant 0 : index
    %c0_3 = arith.constant 0 : index
    %3 = vector.load %arg4[%c0_2, %c0_3] : memref<32x32xbf16, #tpu.memory_space<vmem>>, vector<32x32xbf16>
    %cst = arith.constant dense<0.000000e+00> : vector<8x32xf32>
    %4 = tpu.matmul %2, %3, %cst {dimension_numbers = #tpu.dot_dimension_numbers<[1], [0], [0], [1], [0, 0, 1, 1], [], []>} : vector<8x32xbf16>, vector<32x32xbf16>, vector<8x32xf32> -> vector<8x32xf32>
    %c0_4 = arith.constant 0 : index
    %c0_5 = arith.constant 0 : index
    %5 = vector.load %arg7[%c0_4, %c0_5] : memref<1x32xf32, #tpu.memory_space<vmem>>, vector<1x32xf32>
    %6 = vector.broadcast %5 : vector<1x32xf32> to vector<8x32xf32>
    %7 = arith.addf %4, %6 : vector<8x32xf32>
    %8 = arith.truncf %7 : vector<8x32xf32> to vector<8x32xbf16>
    %c0_6 = arith.constant 0 : index
    %c0_7 = arith.constant 0 : index
    %c0_8 = arith.constant 0 : index
    %9 = vector.load %arg2[%c0_6, %c0_7, %c0_8] : memref<1x8x32xf32, #tpu.memory_space<vmem>>, vector<1x8x32xf32>
    %10 = vector.shape_cast %9 : vector<1x8x32xf32> to vector<8x32xf32>
    %11 = arith.truncf %10 : vector<8x32xf32> to vector<8x32xbf16>
    %c0_9 = arith.constant 0 : index
    %c0_10 = arith.constant 0 : index
    %12 = vector.load %arg5[%c0_9, %c0_10] : memref<32x32xbf16, #tpu.memory_space<vmem>>, vector<32x32xbf16>
    %cst_11 = arith.constant dense<0.000000e+00> : vector<8x32xf32>
    %13 = tpu.matmul %11, %12, %cst_11 {dimension_numbers = #tpu.dot_dimension_numbers<[1], [0], [0], [1], [0, 0, 1, 1], [], []>} : vector<8x32xbf16>, vector<32x32xbf16>, vector<8x32xf32> -> vector<8x32xf32>
    %c0_12 = arith.constant 0 : index
    %c0_13 = arith.constant 0 : index
    %14 = vector.load %arg8[%c0_12, %c0_13] : memref<1x32xf32, #tpu.memory_space<vmem>>, vector<1x32xf32>
    %15 = vector.broadcast %14 : vector<1x32xf32> to vector<8x32xf32>
    %16 = arith.addf %13, %15 : vector<8x32xf32>
    %17 = arith.truncf %16 : vector<8x32xf32> to vector<8x32xbf16>
    %c0_14 = arith.constant 0 : index
    %c0_15 = arith.constant 0 : index
    %c0_16 = arith.constant 0 : index
    %18 = vector.load %arg3[%c0_14, %c0_15, %c0_16] : memref<1x8x32xf32, #tpu.memory_space<vmem>>, vector<1x8x32xf32>
    %19 = vector.shape_cast %18 : vector<1x8x32xf32> to vector<8x32xf32>
    %20 = arith.truncf %19 : vector<8x32xf32> to vector<8x32xbf16>
    %c0_17 = arith.constant 0 : index
    %c0_18 = arith.constant 0 : index
    %21 = vector.load %arg6[%c0_17, %c0_18] : memref<32x32xbf16, #tpu.memory_space<vmem>>, vector<32x32xbf16>
    %cst_19 = arith.constant dense<0.000000e+00> : vector<8x32xf32>
    %22 = tpu.matmul %20, %21, %cst_19 {dimension_numbers = #tpu.dot_dimension_numbers<[1], [0], [0], [1], [0, 0, 1, 1], [], []>} : vector<8x32xbf16>, vector<32x32xbf16>, vector<8x32xf32> -> vector<8x32xf32>
    %c0_20 = arith.constant 0 : index
    %c0_21 = arith.constant 0 : index
    %23 = vector.load %arg9[%c0_20, %c0_21] : memref<1x32xf32, #tpu.memory_space<vmem>>, vector<1x32xf32>
    %24 = vector.broadcast %23 : vector<1x32xf32> to vector<8x32xf32>
    %25 = arith.addf %22, %24 : vector<8x32xf32>
    %26 = arith.truncf %25 : vector<8x32xf32> to vector<8x32xbf16>
    %27 = vector.extract_strided_slice %8 {offsets = [0, 0], sizes = [8, 8], strides = [1, 1]} : vector<8x32xbf16> to vector<8x8xbf16>
    %28 = vector.extract_strided_slice %17 {offsets = [0, 0], sizes = [8, 8], strides = [1, 1]} : vector<8x32xbf16> to vector<8x8xbf16>
    %29 = vector.extract_strided_slice %26 {offsets = [0, 0], sizes = [8, 8], strides = [1, 1]} : vector<8x32xbf16> to vector<8x8xbf16>
    %cst_22 = arith.constant dense<0.000000e+00> : vector<8x8xf32>
    %30 = tpu.matmul %27, %28, %cst_22 {dimension_numbers = #tpu.dot_dimension_numbers<[1], [1], [0], [0], [0, 0, 1, 0], [], []>} : vector<8x8xbf16>, vector<8x8xbf16>, vector<8x8xf32> -> vector<8x8xf32>
    %cst_23 = arith.constant dense<0xFF800000> : vector<8xf32>
    %31 = vector.multi_reduction <maximumf>, %30, %cst_23 [1] : vector<8x8xf32> to vector<8xf32>
    %32 = vector.shape_cast %31 : vector<8xf32> to vector<8x1xf32>
    %33 = vector.broadcast %32 : vector<8x1xf32> to vector<8x8xf32>
    %34 = arith.subf %30, %33 : vector<8x8xf32>
    %35 = math.exp %34 : vector<8x8xf32>
    %cst_24 = arith.constant dense<0.000000e+00> : vector<8xf32>
    %36 = vector.multi_reduction <add>, %35, %cst_24 [1] : vector<8x8xf32> to vector<8xf32>
    %37 = vector.shape_cast %36 : vector<8xf32> to vector<8x1xf32>
    %38 = arith.truncf %35 : vector<8x8xf32> to vector<8x8xbf16>
    %cst_25 = arith.constant dense<0.000000e+00> : vector<8x8xf32>
    %39 = tpu.matmul %38, %29, %cst_25 {dimension_numbers = #tpu.dot_dimension_numbers<[1], [0], [0], [1], [0, 0, 1, 1], [], []>} : vector<8x8xbf16>, vector<8x8xbf16>, vector<8x8xf32> -> vector<8x8xf32>
    %40 = tpu.reciprocal %37 {approx = true} : vector<8x1xf32> -> vector<8x1xf32>
    %41 = vector.broadcast %40 : vector<8x1xf32> to vector<8x8xf32>
    %42 = arith.mulf %39, %41 : vector<8x8xf32>
    %c0_26 = arith.constant 0 : index
    %c0_27 = arith.constant 0 : index
    %43 = vector.load %arg13[%c0_26, %c0_27] : memref<8x32xf32, #tpu.memory_space<vmem>>, vector<8x8xf32>
    tpu.vector_store %arg13[%c0_26, %c0_27], %42 {strides = array<i32>} : memref<8x32xf32, #tpu.memory_space<vmem>>, vector<8x8xf32>,
    %44 = vector.extract_strided_slice %8 {offsets = [0, 8], sizes = [8, 8], strides = [1, 1]} : vector<8x32xbf16> to vector<8x8xbf16>
    %45 = vector.extract_strided_slice %17 {offsets = [0, 8], sizes = [8, 8], strides = [1, 1]} : vector<8x32xbf16> to vector<8x8xbf16>
    %46 = vector.extract_strided_slice %26 {offsets = [0, 8], sizes = [8, 8], strides = [1, 1]} : vector<8x32xbf16> to vector<8x8xbf16>
    %cst_28 = arith.constant dense<0.000000e+00> : vector<8x8xf32>
    %47 = tpu.matmul %44, %45, %cst_28 {dimension_numbers = #tpu.dot_dimension_numbers<[1], [1], [0], [0], [0, 0, 1, 0], [], []>} : vector<8x8xbf16>, vector<8x8xbf16>, vector<8x8xf32> -> vector<8x8xf32>
    %cst_29 = arith.constant dense<0xFF800000> : vector<8xf32>
    %48 = vector.multi_reduction <maximumf>, %47, %cst_29 [1] : vector<8x8xf32> to vector<8xf32>
    %49 = vector.shape_cast %48 : vector<8xf32> to vector<8x1xf32>
    %50 = vector.broadcast %49 : vector<8x1xf32> to vector<8x8xf32>
    %51 = arith.subf %47, %50 : vector<8x8xf32>
    %52 = math.exp %51 : vector<8x8xf32>
    %cst_30 = arith.constant dense<0.000000e+00> : vector<8xf32>
    %53 = vector.multi_reduction <add>, %52, %cst_30 [1] : vector<8x8xf32> to vector<8xf32>
    %54 = vector.shape_cast %53 : vector<8xf32> to vector<8x1xf32>
    %55 = arith.truncf %52 : vector<8x8xf32> to vector<8x8xbf16>
    %cst_31 = arith.constant dense<0.000000e+00> : vector<8x8xf32>
    %56 = tpu.matmul %55, %46, %cst_31 {dimension_numbers = #tpu.dot_dimension_numbers<[1], [0], [0], [1], [0, 0, 1, 1], [], []>} : vector<8x8xbf16>, vector<8x8xbf16>, vector<8x8xf32> -> vector<8x8xf32>
    %57 = tpu.reciprocal %54 {approx = true} : vector<8x1xf32> -> vector<8x1xf32>
    %58 = vector.broadcast %57 : vector<8x1xf32> to vector<8x8xf32>
    %59 = arith.mulf %56, %58 : vector<8x8xf32>
    %c0_32 = arith.constant 0 : index
    %c8 = arith.constant 8 : index
    %60 = vector.load %arg13[%c0_32, %c8] : memref<8x32xf32, #tpu.memory_space<vmem>>, vector<8x8xf32>
    tpu.vector_store %arg13[%c0_32, %c8], %59 {strides = array<i32>} : memref<8x32xf32, #tpu.memory_space<vmem>>, vector<8x8xf32>,
    %61 = vector.extract_strided_slice %8 {offsets = [0, 16], sizes = [8, 8], strides = [1, 1]} : vector<8x32xbf16> to vector<8x8xbf16>
    %62 = vector.extract_strided_slice %17 {offsets = [0, 16], sizes = [8, 8], strides = [1, 1]} : vector<8x32xbf16> to vector<8x8xbf16>
    %63 = vector.extract_strided_slice %26 {offsets = [0, 16], sizes = [8, 8], strides = [1, 1]} : vector<8x32xbf16> to vector<8x8xbf16>
    %cst_33 = arith.constant dense<0.000000e+00> : vector<8x8xf32>
    %64 = tpu.matmul %61, %62, %cst_33 {dimension_numbers = #tpu.dot_dimension_numbers<[1], [1], [0], [0], [0, 0, 1, 0], [], []>} : vector<8x8xbf16>, vector<8x8xbf16>, vector<8x8xf32> -> vector<8x8xf32>
    %cst_34 = arith.constant dense<0xFF800000> : vector<8xf32>
    %65 = vector.multi_reduction <maximumf>, %64, %cst_34 [1] : vector<8x8xf32> to vector<8xf32>
    %66 = vector.shape_cast %65 : vector<8xf32> to vector<8x1xf32>
    %67 = vector.broadcast %66 : vector<8x1xf32> to vector<8x8xf32>
    %68 = arith.subf %64, %67 : vector<8x8xf32>
    %69 = math.exp %68 : vector<8x8xf32>
    %cst_35 = arith.constant dense<0.000000e+00> : vector<8xf32>
    %70 = vector.multi_reduction <add>, %69, %cst_35 [1] : vector<8x8xf32> to vector<8xf32>
    %71 = vector.shape_cast %70 : vector<8xf32> to vector<8x1xf32>
    %72 = arith.truncf %69 : vector<8x8xf32> to vector<8x8xbf16>
    %cst_36 = arith.constant dense<0.000000e+00> : vector<8x8xf32>
    %73 = tpu.matmul %72, %63, %cst_36 {dimension_numbers = #tpu.dot_dimension_numbers<[1], [0], [0], [1], [0, 0, 1, 1], [], []>} : vector<8x8xbf16>, vector<8x8xbf16>, vector<8x8xf32> -> vector<8x8xf32>
    %74 = tpu.reciprocal %71 {approx = true} : vector<8x1xf32> -> vector<8x1xf32>
    %75 = vector.broadcast %74 : vector<8x1xf32> to vector<8x8xf32>
    %76 = arith.mulf %73, %75 : vector<8x8xf32>
    %c0_37 = arith.constant 0 : index
    %c16 = arith.constant 16 : index
    %77 = vector.load %arg13[%c0_37, %c16] : memref<8x32xf32, #tpu.memory_space<vmem>>, vector<8x8xf32>
    tpu.vector_store %arg13[%c0_37, %c16], %76 {strides = array<i32>} : memref<8x32xf32, #tpu.memory_space<vmem>>, vector<8x8xf32>,
    %78 = vector.extract_strided_slice %8 {offsets = [0, 24], sizes = [8, 8], strides = [1, 1]} : vector<8x32xbf16> to vector<8x8xbf16>
    %79 = vector.extract_strided_slice %17 {offsets = [0, 24], sizes = [8, 8], strides = [1, 1]} : vector<8x32xbf16> to vector<8x8xbf16>
    %80 = vector.extract_strided_slice %26 {offsets = [0, 24], sizes = [8, 8], strides = [1, 1]} : vector<8x32xbf16> to vector<8x8xbf16>
    %cst_38 = arith.constant dense<0.000000e+00> : vector<8x8xf32>
    %81 = tpu.matmul %78, %79, %cst_38 {dimension_numbers = #tpu.dot_dimension_numbers<[1], [1], [0], [0], [0, 0, 1, 0], [], []>} : vector<8x8xbf16>, vector<8x8xbf16>, vector<8x8xf32> -> vector<8x8xf32>
    %cst_39 = arith.constant dense<0xFF800000> : vector<8xf32>
    %82 = vector.multi_reduction <maximumf>, %81, %cst_39 [1] : vector<8x8xf32> to vector<8xf32>
    %83 = vector.shape_cast %82 : vector<8xf32> to vector<8x1xf32>
    %84 = vector.broadcast %83 : vector<8x1xf32> to vector<8x8xf32>
    %85 = arith.subf %81, %84 : vector<8x8xf32>
    %86 = math.exp %85 : vector<8x8xf32>
    %cst_40 = arith.constant dense<0.000000e+00> : vector<8xf32>
    %87 = vector.multi_reduction <add>, %86, %cst_40 [1] : vector<8x8xf32> to vector<8xf32>
    %88 = vector.shape_cast %87 : vector<8xf32> to vector<8x1xf32>
    %89 = arith.truncf %86 : vector<8x8xf32> to vector<8x8xbf16>
    %cst_41 = arith.constant dense<0.000000e+00> : vector<8x8xf32>
    %90 = tpu.matmul %89, %80, %cst_41 {dimension_numbers = #tpu.dot_dimension_numbers<[1], [0], [0], [1], [0, 0, 1, 1], [], []>} : vector<8x8xbf16>, vector<8x8xbf16>, vector<8x8xf32> -> vector<8x8xf32>
    %91 = tpu.reciprocal %88 {approx = true} : vector<8x1xf32> -> vector<8x1xf32>
    %92 = vector.broadcast %91 : vector<8x1xf32> to vector<8x8xf32>
    %93 = arith.mulf %90, %92 : vector<8x8xf32>
    %c0_42 = arith.constant 0 : index
    %c24 = arith.constant 24 : index
    %94 = vector.load %arg13[%c0_42, %c24] : memref<8x32xf32, #tpu.memory_space<vmem>>, vector<8x8xf32>
    tpu.vector_store %arg13[%c0_42, %c24], %93 {strides = array<i32>} : memref<8x32xf32, #tpu.memory_space<vmem>>, vector<8x8xf32>,
    %c0_43 = arith.constant 0 : index
    %c0_44 = arith.constant 0 : index
    %95 = vector.load %arg13[%c0_43, %c0_44] : memref<8x32xf32, #tpu.memory_space<vmem>>, vector<8x32xf32>
    %96 = arith.truncf %95 : vector<8x32xf32> to vector<8x32xbf16>
    %c0_45 = arith.constant 0 : index
    %c0_46 = arith.constant 0 : index
    %97 = vector.load %arg10[%c0_45, %c0_46] : memref<32x32xbf16, #tpu.memory_space<vmem>>, vector<32x32xbf16>
    %cst_47 = arith.constant dense<0.000000e+00> : vector<8x32xf32>
    %98 = tpu.matmul %96, %97, %cst_47 {dimension_numbers = #tpu.dot_dimension_numbers<[1], [0], [0], [1], [0, 0, 1, 1], [], []>} : vector<8x32xbf16>, vector<32x32xbf16>, vector<8x32xf32> -> vector<8x32xf32>
    %c0_48 = arith.constant 0 : index
    %c0_49 = arith.constant 0 : index
    %99 = vector.load %arg11[%c0_48, %c0_49] : memref<1x32xf32, #tpu.memory_space<vmem>>, vector<1x32xf32>
    %100 = vector.broadcast %99 : vector<1x32xf32> to vector<8x32xf32>
    %101 = arith.addf %98, %100 : vector<8x32xf32>
    %c0_50 = arith.constant 0 : index
    %c0_51 = arith.constant 0 : index
    %c0_52 = arith.constant 0 : index
    %102 = vector.load %arg12[%c0_50, %c0_51, %c0_52] : memref<1x8x32xf32, #tpu.memory_space<vmem>>, vector<1x8x32xf32>
    %103 = vector.shape_cast %102 : vector<1x8x32xf32> to vector<8x32xf32>
    %104 = vector.shape_cast %101 : vector<8x32xf32> to vector<1x8x32xf32>
    tpu.vector_store %arg12[%c0_50, %c0_51, %c0_52], %104 {strides = array<i32>} : memref<1x8x32xf32, #tpu.memory_space<vmem>>, vector<1x8x32xf32>,
    return
  }
  func.func @transform_0(%arg0: i32) -> (i32, i32, i32) {
    %c0_i32 = arith.constant 0 : i32
    %c0_i32_0 = arith.constant 0 : i32
    %c0_i32_1 = arith.constant 0 : i32
    return %arg0, %c0_i32, %c0_i32_0 : i32, i32, i32
  }
  func.func @transform_1(%arg0: i32) -> (i32, i32, i32) {
    %c0_i32 = arith.constant 0 : i32
    %c0_i32_0 = arith.constant 0 : i32
    %c0_i32_1 = arith.constant 0 : i32
    return %arg0, %c0_i32, %c0_i32_0 : i32, i32, i32
  }
  func.func @transform_2(%arg0: i32) -> (i32, i32, i32) {
    %c0_i32 = arith.constant 0 : i32
    %c0_i32_0 = arith.constant 0 : i32
    %c0_i32_1 = arith.constant 0 : i32
    return %arg0, %c0_i32, %c0_i32_0 : i32, i32, i32
  }
  func.func @transform_3(%arg0: i32) -> (i32, i32) {
    %c0_i32 = arith.constant 0 : i32
    %c0_i32_0 = arith.constant 0 : i32
    %c0_i32_1 = arith.constant 0 : i32
    return %c0_i32, %c0_i32_0 : i32, i32
  }
  func.func @transform_4(%arg0: i32) -> (i32, i32) {
    %c0_i32 = arith.constant 0 : i32
    %c0_i32_0 = arith.constant 0 : i32
    %c0_i32_1 = arith.constant 0 : i32
    return %c0_i32, %c0_i32_0 : i32, i32
  }
  func.func @transform_5(%arg0: i32) -> (i32, i32) {
    %c0_i32 = arith.constant 0 : i32
    %c0_i32_0 = arith.constant 0 : i32
    %c0_i32_1 = arith.constant 0 : i32
    return %c0_i32, %c0_i32_0 : i32, i32
  }
  func.func @transform_6(%arg0: i32) -> (i32, i32) {
    %c0_i32 = arith.constant 0 : i32
    %c0_i32_0 = arith.constant 0 : i32
    %c0_i32_1 = arith.constant 0 : i32
    return %c0_i32, %c0_i32_0 : i32, i32
  }
  func.func @transform_7(%arg0: i32) -> (i32, i32) {
    %c0_i32 = arith.constant 0 : i32
    %c0_i32_0 = arith.constant 0 : i32
    %c0_i32_1 = arith.constant 0 : i32
    return %c0_i32, %c0_i32_0 : i32, i32
  }
  func.func @transform_8(%arg0: i32) -> (i32, i32) {
    %c0_i32 = arith.constant 0 : i32
    %c0_i32_0 = arith.constant 0 : i32
    %c0_i32_1 = arith.constant 0 : i32
    return %c0_i32, %c0_i32_0 : i32, i32
  }
  func.func @transform_9(%arg0: i32) -> (i32, i32) {
    %c0_i32 = arith.constant 0 : i32
    %c0_i32_0 = arith.constant 0 : i32
    %c0_i32_1 = arith.constant 0 : i32
    return %c0_i32, %c0_i32_0 : i32, i32
  }
  func.func @transform_10(%arg0: i32) -> (i32, i32) {
    %c0_i32 = arith.constant 0 : i32
    %c0_i32_0 = arith.constant 0 : i32
    %c0_i32_1 = arith.constant 0 : i32
    return %c0_i32, %c0_i32_0 : i32, i32
  }
  func.func @transform_11(%arg0: i32) -> (i32, i32, i32) {
    %c0_i32 = arith.constant 0 : i32
    %c0_i32_0 = arith.constant 0 : i32
    %c0_i32_1 = arith.constant 0 : i32
    return %arg0, %c0_i32, %c0_i32_0 : i32, i32, i32
  }
}

</mosaic_0001>

<llo_original>
// kernel: tpu_custom_call.1
$region0: #{tpu_custom_call.1}
  #allocation0 [shape = 'u32[]', space=smem, size = 0x4, offset = 0x4, fixed_abs, tag = 'smem constant byte address 0x4 - core index']
  #allocation1 [shape = 'u32[144,128]{1,0:T(1,128)}', space=vmem, size = 0x12000, scoped, tag = 'internal scratch']
  #allocation2 [shape = 'f32[8,32]{1,0:T(8,128)}', space=vmem, size = 0x1000, scoped, tag = 'scratch operand']
  %s0 = inlined_call_operand.hbm [shape: f32[4,8,32], index: 0, kind: input, shape index: {}]
  %s1 = inlined_call_operand.hbm [shape: f32[4,8,32], index: 1, kind: input, shape index: {}]
  %s2 = inlined_call_operand.hbm [shape: f32[4,8,32], index: 2, kind: input, shape index: {}]
  %s3 = inlined_call_operand.hbm [shape: bf16[32,32], index: 3, kind: input, shape index: {}]
  %s4 = inlined_call_operand.hbm [shape: bf16[32,32], index: 4, kind: input, shape index: {}]
  %s5 = inlined_call_operand.vmem [shape: bf16[32,32], index: 5, kind: input, shape index: {}]
  %s6 = inlined_call_operand.vmem [shape: f32[1,32], index: 6, kind: input, shape index: {}]
  %s7 = inlined_call_operand.vmem [shape: f32[1,32], index: 7, kind: input, shape index: {}]
  %s8 = inlined_call_operand.hbm [shape: f32[1,32], index: 8, kind: input, shape index: {}]
  %s9 = inlined_call_operand.vmem [shape: bf16[32,32], index: 9, kind: input, shape index: {}]
  %s10 = inlined_call_operand.vmem [shape: f32[1,32], index: 10, kind: input, shape index: {}]
  %s11 = inlined_call_operand.hbm [shape: f32[4,8,32], index: 11, kind: output, shape index: {}]
  %s12 = sld [smem:[#allocation0]]
  $region101: #{tpu_custom_call.1} parent=0
    _
  %s14 = ssub.s32 1, %s12
  %s15 = scalar_select 0, %s14, %s12
  $region1: #{tpu_custom_call.1} parent=0
    #allocation3 [shape = 'u8[8192]{0}', space=vmem, size = 0x2000, scoped, tag = 'input window, operand 0']
    #allocation4 [shape = 's32[2]{0}', space=sflag, size = 0x8, scoped, tag = 'scoped memory for tpu_custom_call.1']
    #allocation5 [shape = 's32[2]{0}', space=sflag, size = 0x8, scoped, tag = 'scoped memory for tpu_custom_call.1']
    #allocation6 [shape = 'u8[8192]{0}', space=vmem, size = 0x2000, scoped, tag = 'input window, operand 1']
    #allocation7 [shape = 's32[2]{0}', space=sflag, size = 0x8, scoped, tag = 'scoped memory for tpu_custom_call.1']
    #allocation8 [shape = 'u8[8192]{0}', space=vmem, size = 0x2000, scoped, tag = 'input window, operand 2']
    #allocation9 [shape = 'u8[8192]{0}', space=vmem, size = 0x2000, scoped, tag = 'input window, operand 3, single buffered']
    #allocation10 [shape = 's32[1]{0}', space=sflag, size = 0x4, scoped, tag = 'scoped memory for tpu_custom_call.1']
    #allocation11 [shape = 'u8[8192]{0}', space=vmem, size = 0x2000, scoped, tag = 'input window, operand 4, single buffered']
    #allocation12 [shape = 'u8[512]{0}', space=vmem, size = 0x400, scoped, tag = 'input window, operand 8, single buffered']
    #allocation13 [shape = 's32[1]{0}', space=sflag, size = 0x4, scoped, tag = 'scoped memory for tpu_custom_call.1']
    #allocation14 [shape = 'u8[8192]{0}', space=vmem, size = 0x2000, scoped, tag = 'output window, operand 0']
    %16 = vsyncpa [#allocation4], 0
    %s17 = scalar_lea.sflag [#allocation4], 1
    %18 = vsyncpa %s17, 0
    %19 = vsyncpa [#allocation7], 0
    %s20 = scalar_lea.sflag [#allocation7], 1
    %21 = vsyncpa %s20, 0
    %22 = vsyncpa [#allocation10], 0
    %23 = vsyncpa [#allocation13], 0
    %24 = vsyncpa [#allocation5], 0
    %s25 = scalar_lea.sflag [#allocation5], 1
    %26 = vsyncpa %s25, 0
    loop: start=0, step=1, limit=6
    $region2: #{tpu_custom_call.1} parent=1 // loop_pre_header
      _
    $region3: #{tpu_custom_call.1} parent=1 // loop_header
      %s28 = sphi 0, %s32
      %p29 = scmp.ge.s32.totalorder %s28, 6
      %s38 = sphi 0, %s40
      %s41 = sphi 0, %s38
      %s42 = sphi 0, %s41
      %s58 = sphi 0, %s42
      %s64 = sphi 0, %s66
      %s67 = sphi 0, %s64
      %s68 = sphi 0, %s67
      %s84 = sphi 0, %s68
      %s90 = sphi 0, %s92
      %s93 = sphi 0, %s90
      %s94 = sphi 0, %s93
      %s110 = sphi 0, %s94
      %s114 = sphi 0, %s114
      %s116 = sphi 0, %s114
      %s117 = sphi 0, %s116
      %s131 = sphi 0, %s117
      %s135 = sphi 0, %s135
      %s137 = sphi 0, %s135
      %s138 = sphi 0, %s137
      %s152 = sphi 0, %s138
      %s156 = sphi 0, %s156
      %s158 = sphi 0, %s156
      %s159 = sphi 0, %s158
      %s173 = sphi 0, %s159
      %s177 = sphi 0, %s177
      %s179 = sphi 0, %s177
      %s180 = sphi 0, %s179
      %s194 = sphi 0, %s180
      %s198 = sphi 0, %s198
      %s200 = sphi 0, %s198
      %s201 = sphi 0, %s200
      %s215 = sphi 0, %s201
      %s219 = sphi 0, %s219
      %s221 = sphi 0, %s219
      %s222 = sphi 0, %s221
      %s236 = sphi 0, %s222
      %s240 = sphi 0, %s240
      %s242 = sphi 0, %s240
      %s243 = sphi 0, %s242
      %s257 = sphi 0, %s243
      %s261 = sphi 0, %s261
      %s263 = sphi 0, %s261
      %s264 = sphi 0, %s263
      %s278 = sphi 0, %s264
      %s284 = sphi 0, %s286
      %s287 = sphi 0, %s284
      %s288 = sphi 0, %s287
      %s304 = sphi 0, %s288
    $region4: #{tpu_custom_call.1} parent=1 // loop_header_branch
      %31 = sbr.rel (%p29) target = $region8
    $region5: #{tpu_custom_call.1} parent=1 // loop_body
      %s33 = ssub.s32 %s28, 1
      %s34 = ssub.s32 %s28, 2
      %s35 = sadd.s32 %s28, 1
      %s36 = ssub.s32 %s28, %s35
      %p37 = scmp.eq.s32.totalorder %s36, 0
      %s39 = sadd.s32 %s38, 1
      %s40 = scalar_select %p37, %s38, %s39
      %p43 = pneg %p37
      %p44 = scmp.eq.s32.totalorder %s28, 3
      %p45 = por %p43, %p44
      %p46 = scmp.ne.s32.totalorder %s38, %s41
      %p47 = scmp.eq.s32.totalorder %s28, 0
      %p48 = por %p46, %p47
      %p49 = scmp.ne.s32.totalorder %s38, %s41
      %p50 = scmp.eq.s32.totalorder %s33, 3
      %p51 = por %p49, %p50
      %p52 = scmp.ne.s32.totalorder %s41, %s42
      %p53 = scmp.eq.s32.totalorder %s33, 0
      %p54 = por %p52, %p53
      %p55 = scmp.ne.s32.totalorder %s41, %s42
      %p56 = scmp.eq.s32.totalorder %s34, 3
      %p57 = por %p55, %p56
      %p59 = scmp.ne.s32.totalorder %s42, %s58
      %p60 = scmp.eq.s32.totalorder %s34, 0
      %p61 = por %p59, %p60
      %s62 = ssub.s32 %s28, %s35
      %p63 = scmp.eq.s32.totalorder %s62, 0
      %s65 = sadd.s32 %s64, 1
      %s66 = scalar_select %p63, %s64, %s65
      %p69 = pneg %p63
      %p70 = scmp.eq.s32.totalorder %s28, 3
      %p71 = por %p69, %p70
      %p72 = scmp.ne.s32.totalorder %s64, %s67
      %p73 = scmp.eq.s32.totalorder %s28, 0
      %p74 = por %p72, %p73
      %p75 = scmp.ne.s32.totalorder %s64, %s67
      %p76 = scmp.eq.s32.totalorder %s33, 3
      %p77 = por %p75, %p76
      %p78 = scmp.ne.s32.totalorder %s67, %s68
      %p79 = scmp.eq.s32.totalorder %s33, 0
      %p80 = por %p78, %p79
      %p81 = scmp.ne.s32.totalorder %s67, %s68
      %p82 = scmp.eq.s32.totalorder %s34, 3
      %p83 = por %p81, %p82
      %p85 = scmp.ne.s32.totalorder %s68, %s84
      %p86 = scmp.eq.s32.totalorder %s34, 0
      %p87 = por %p85, %p86
      %s88 = ssub.s32 %s28, %s35
      %p89 = scmp.eq.s32.totalorder %s88, 0
      %s91 = sadd.s32 %s90, 1
      %s92 = scalar_select %p89, %s90, %s91
      %p95 = pneg %p89
      %p96 = scmp.eq.s32.totalorder %s28, 3
      %p97 = por %p95, %p96
      %p98 = scmp.ne.s32.totalorder %s90, %s93
      %p99 = scmp.eq.s32.totalorder %s28, 0
      %p100 = por %p98, %p99
      %p101 = scmp.ne.s32.totalorder %s90, %s93
      %p102 = scmp.eq.s32.totalorder %s33, 3
      %p103 = por %p101, %p102
      %p104 = scmp.ne.s32.totalorder %s93, %s94
      %p105 = scmp.eq.s32.totalorder %s33, 0
      %p106 = por %p104, %p105
      %p107 = scmp.ne.s32.totalorder %s93, %s94
      %p108 = scmp.eq.s32.totalorder %s34, 3
      %p109 = por %p107, %p108
      %p111 = scmp.ne.s32.totalorder %s94, %s110
      %p112 = scmp.eq.s32.totalorder %s34, 0
      %p113 = por %p111, %p112
      %s115 = sadd.s32 %s114, 1
      %p118 = scmp.eq.s32.totalorder %s28, 3
      %p119 = scmp.ne.s32.totalorder %s114, %s116
      %p120 = scmp.eq.s32.totalorder %s28, 0
      %p121 = por %p119, %p120
      %p122 = scmp.ne.s32.totalorder %s114, %s116
      %p123 = scmp.eq.s32.totalorder %s33, 3
      %p124 = por %p122, %p123
      %p125 = scmp.ne.s32.totalorder %s116, %s117
      %p126 = scmp.eq.s32.totalorder %s33, 0
      %p127 = por %p125, %p126
      %p128 = scmp.ne.s32.totalorder %s116, %s117
      %p129 = scmp.eq.s32.totalorder %s34, 3
      %p130 = por %p128, %p129
      %p132 = scmp.ne.s32.totalorder %s117, %s131
      %p133 = scmp.eq.s32.totalorder %s34, 0
      %p134 = por %p132, %p133
      %s136 = sadd.s32 %s135, 1
      %p139 = scmp.eq.s32.totalorder %s28, 3
      %p140 = scmp.ne.s32.totalorder %s135, %s137
      %p141 = scmp.eq.s32.totalorder %s28, 0
      %p142 = por %p140, %p141
      %p143 = scmp.ne.s32.totalorder %s135, %s137
      %p144 = scmp.eq.s32.totalorder %s33, 3
      %p145 = por %p143, %p144
      %p146 = scmp.ne.s32.totalorder %s137, %s138
      %p147 = scmp.eq.s32.totalorder %s33, 0
      %p148 = por %p146, %p147
      %p149 = scmp.ne.s32.totalorder %s137, %s138
      %p150 = scmp.eq.s32.totalorder %s34, 3
      %p151 = por %p149, %p150
      %p153 = scmp.ne.s32.totalorder %s138, %s152
      %p154 = scmp.eq.s32.totalorder %s34, 0
      %p155 = por %p153, %p154
      %s157 = sadd.s32 %s156, 1
      %p160 = scmp.eq.s32.totalorder %s28, 3
      %p161 = scmp.ne.s32.totalorder %s156, %s158
      %p162 = scmp.eq.s32.totalorder %s28, 0
      %p163 = por %p161, %p162
      %p164 = scmp.ne.s32.totalorder %s156, %s158
      %p165 = scmp.eq.s32.totalorder %s33, 3
      %p166 = por %p164, %p165
      %p167 = scmp.ne.s32.totalorder %s158, %s159
      %p168 = scmp.eq.s32.totalorder %s33, 0
      %p169 = por %p167, %p168
      %p170 = scmp.ne.s32.totalorder %s158, %s159
      %p171 = scmp.eq.s32.totalorder %s34, 3
      %p172 = por %p170, %p171
      %p174 = scmp.ne.s32.totalorder %s159, %s173
      %p175 = scmp.eq.s32.totalorder %s34, 0
      %p176 = por %p174, %p175
      %s178 = sadd.s32 %s177, 1
      %p181 = scmp.eq.s32.totalorder %s28, 3
      %p182 = scmp.ne.s32.totalorder %s177, %s179
      %p183 = scmp.eq.s32.totalorder %s28, 0
      %p184 = por %p182, %p183
      %p185 = scmp.ne.s32.totalorder %s177, %s179
      %p186 = scmp.eq.s32.totalorder %s33, 3
      %p187 = por %p185, %p186
      %p188 = scmp.ne.s32.totalorder %s179, %s180
      %p189 = scmp.eq.s32.totalorder %s33, 0
      %p190 = por %p188, %p189
      %p191 = scmp.ne.s32.totalorder %s179, %s180
      %p192 = scmp.eq.s32.totalorder %s34, 3
      %p193 = por %p191, %p192
      %p195 = scmp.ne.s32.totalorder %s180, %s194
      %p196 = scmp.eq.s32.totalorder %s34, 0
      %p197 = por %p195, %p196
      %s199 = sadd.s32 %s198, 1
      %p202 = scmp.eq.s32.totalorder %s28, 3
      %p203 = scmp.ne.s32.totalorder %s198, %s200
      %p204 = scmp.eq.s32.totalorder %s28, 0
      %p205 = por %p203, %p204
      %p206 = scmp.ne.s32.totalorder %s198, %s200
      %p207 = scmp.eq.s32.totalorder %s33, 3
      %p208 = por %p206, %p207
      %p209 = scmp.ne.s32.totalorder %s200, %s201
      %p210 = scmp.eq.s32.totalorder %s33, 0
      %p211 = por %p209, %p210
      %p212 = scmp.ne.s32.totalorder %s200, %s201
      %p213 = scmp.eq.s32.totalorder %s34, 3
      %p214 = por %p212, %p213
      %p216 = scmp.ne.s32.totalorder %s201, %s215
      %p217 = scmp.eq.s32.totalorder %s34, 0
      %p218 = por %p216, %p217
      %s220 = sadd.s32 %s219, 1
      %p223 = scmp.eq.s32.totalorder %s28, 3
      %p224 = scmp.ne.s32.totalorder %s219, %s221
      %p225 = scmp.eq.s32.totalorder %s28, 0
      %p226 = por %p224, %p225
      %p227 = scmp.ne.s32.totalorder %s219, %s221
      %p228 = scmp.eq.s32.totalorder %s33, 3
      %p229 = por %p227, %p228
      %p230 = scmp.ne.s32.totalorder %s221, %s222
      %p231 = scmp.eq.s32.totalorder %s33, 0
      %p232 = por %p230, %p231
      %p233 = scmp.ne.s32.totalorder %s221, %s222
      %p234 = scmp.eq.s32.totalorder %s34, 3
      %p235 = por %p233, %p234
      %p237 = scmp.ne.s32.totalorder %s222, %s236
      %p238 = scmp.eq.s32.totalorder %s34, 0
      %p239 = por %p237, %p238
      %s241 = sadd.s32 %s240, 1
      %p244 = scmp.eq.s32.totalorder %s28, 3
      %p245 = scmp.ne.s32.totalorder %s240, %s242
      %p246 = scmp.eq.s32.totalorder %s28, 0
      %p247 = por %p245, %p246
      %p248 = scmp.ne.s32.totalorder %s240, %s242
      %p249 = scmp.eq.s32.totalorder %s33, 3
      %p250 = por %p248, %p249
      %p251 = scmp.ne.s32.totalorder %s242, %s243
      %p252 = scmp.eq.s32.totalorder %s33, 0
      %p253 = por %p251, %p252
      %p254 = scmp.ne.s32.totalorder %s242, %s243
      %p255 = scmp.eq.s32.totalorder %s34, 3
      %p256 = por %p254, %p255
      %p258 = scmp.ne.s32.totalorder %s243, %s257
      %p259 = scmp.eq.s32.totalorder %s34, 0
      %p260 = por %p258, %p259
      %s262 = sadd.s32 %s261, 1
      %p265 = scmp.eq.s32.totalorder %s28, 3
      %p266 = scmp.ne.s32.totalorder %s261, %s263
      %p267 = scmp.eq.s32.totalorder %s28, 0
      %p268 = por %p266, %p267
      %p269 = scmp.ne.s32.totalorder %s261, %s263
      %p270 = scmp.eq.s32.totalorder %s33, 3
      %p271 = por %p269, %p270
      %p272 = scmp.ne.s32.totalorder %s263, %s264
      %p273 = scmp.eq.s32.totalorder %s33, 0
      %p274 = por %p272, %p273
      %p275 = scmp.ne.s32.totalorder %s263, %s264
      %p276 = scmp.eq.s32.totalorder %s34, 3
      %p277 = por %p275, %p276
      %p279 = scmp.ne.s32.totalorder %s264, %s278
      %p280 = scmp.eq.s32.totalorder %s34, 0
      %p281 = por %p279, %p280
      %s282 = ssub.s32 %s28, %s35
      %p283 = scmp.eq.s32.totalorder %s282, 0
      %s285 = sadd.s32 %s284, 1
      %s286 = scalar_select %p283, %s284, %s285
      %p289 = pneg %p283
      %p290 = scmp.eq.s32.totalorder %s28, 3
      %p291 = por %p289, %p290
      %p292 = scmp.ne.s32.totalorder %s284, %s287
      %p293 = scmp.eq.s32.totalorder %s28, 0
      %p294 = por %p292, %p293
      %p295 = scmp.ne.s32.totalorder %s284, %s287
      %p296 = scmp.eq.s32.totalorder %s33, 3
      %p297 = por %p295, %p296
      %p298 = scmp.ne.s32.totalorder %s287, %s288
      %p299 = scmp.eq.s32.totalorder %s33, 0
      %p300 = por %p298, %p299
      %p301 = scmp.ne.s32.totalorder %s287, %s288
      %p302 = scmp.eq.s32.totalorder %s34, 3
      %p303 = por %p301, %p302
      %p305 = scmp.ne.s32.totalorder %s288, %s304
      %p306 = scmp.eq.s32.totalorder %s34, 0
      %p307 = por %p305, %p306
      %p308 = scmp.le.s32.totalorder 1, %s28
      %p309 = scmp.lt.s32.totalorder %s28, 5
      %p310 = pnand %p308, %p309
      %p311 = pneg %p310
      // Predicated region
      $region9: #{tpu_custom_call.1} parent=5 // pred_check
        _
      $region10: #{tpu_custom_call.1} parent=5 // pred_check_branch
        %313 = sbr.rel (%p310) target = $region12
      $region11: #{tpu_custom_call.1} parent=5 // pred_region
        %s314 = ssub.s32 %s28, 1
        // Predicated region
        $region13: #{tpu_custom_call.1} parent=11 // pred_check
          %p315 = pneg %p127
        $region14: #{tpu_custom_call.1} parent=11 // pred_check_branch
          %317 = sbr.rel (%p315) target = $region16
        $region15: #{tpu_custom_call.1} parent=11 // pred_region
          %s319 = ssub.s32 256, 256
          %320 = vsyncadd [#allocation10], %s319
          %s321 = sshll.u32 [#allocation9], 4
          %s322 = int_to_ptr.vmem [resolvable:$true] %s321
          %327 = dma.hbm_to_vmem [thread:$0]  %s3, 256, %s322, [#allocation10], 64, 64, 4
        $region16: #{tpu_custom_call.1} parent=11 // pred_fallthru
          _
        // Predicated region
        $region17: #{tpu_custom_call.1} parent=11 // pred_check
          %p328 = pneg %p148
        $region18: #{tpu_custom_call.1} parent=11 // pred_check_branch
          %330 = sbr.rel (%p328) target = $region20
        $region19: #{tpu_custom_call.1} parent=11 // pred_region
          %s332 = ssub.s32 256, 256
          %333 = vsyncadd [#allocation10], %s332
          %s334 = sshll.u32 [#allocation11], 4
          %s335 = int_to_ptr.vmem [resolvable:$true] %s334
          %340 = dma.hbm_to_vmem [thread:$0]  %s4, 256, %s335, [#allocation10], 64, 64, 4
        $region20: #{tpu_custom_call.1} parent=11 // pred_fallthru
          _
        // Predicated region
        $region21: #{tpu_custom_call.1} parent=11 // pred_check
          %p341 = pneg %p169
        $region22: #{tpu_custom_call.1} parent=11 // pred_check_branch
          %343 = sbr.rel (%p341) target = $region24
        $region23: #{tpu_custom_call.1} parent=11 // pred_region
          _
        $region24: #{tpu_custom_call.1} parent=11 // pred_fallthru
          _
        // Predicated region
        $region25: #{tpu_custom_call.1} parent=11 // pred_check
          %p344 = pneg %p190
        $region26: #{tpu_custom_call.1} parent=11 // pred_check_branch
          %346 = sbr.rel (%p344) target = $region28
        $region27: #{tpu_custom_call.1} parent=11 // pred_region
          _
        $region28: #{tpu_custom_call.1} parent=11 // pred_fallthru
          _
        // Predicated region
        $region29: #{tpu_custom_call.1} parent=11 // pred_check
          %p347 = pneg %p211
        $region30: #{tpu_custom_call.1} parent=11 // pred_check_branch
          %349 = sbr.rel (%p347) target = $region32
        $region31: #{tpu_custom_call.1} parent=11 // pred_region
          _
        $region32: #{tpu_custom_call.1} parent=11 // pred_fallthru
          _
        // Predicated region
        $region33: #{tpu_custom_call.1} parent=11 // pred_check
          %p350 = pneg %p232
        $region34: #{tpu_custom_call.1} parent=11 // pred_check_branch
          %352 = sbr.rel (%p350) target = $region36
        $region35: #{tpu_custom_call.1} parent=11 // pred_region
          %s354 = ssub.s32 16, 16
          %355 = vsyncadd [#allocation13], %s354
          %s357 = sshll.u32 [#allocation12], 4
          %s358 = int_to_ptr.vmem [resolvable:$true] %s357
          %360 = dma.hbm_to_vmem [thread:$0]  %s8, 16, %s358, [#allocation13]
        $region36: #{tpu_custom_call.1} parent=11 // pred_fallthru
          _
        // Predicated region
        $region37: #{tpu_custom_call.1} parent=11 // pred_check
          %p361 = pneg %p253
        $region38: #{tpu_custom_call.1} parent=11 // pred_check_branch
          %363 = sbr.rel (%p361) target = $region40
        $region39: #{tpu_custom_call.1} parent=11 // pred_region
          _
        $region40: #{tpu_custom_call.1} parent=11 // pred_fallthru
          _
        // Predicated region
        $region41: #{tpu_custom_call.1} parent=11 // pred_check
          %p364 = pneg %p274
        $region42: #{tpu_custom_call.1} parent=11 // pred_check_branch
          %366 = sbr.rel (%p364) target = $region44
        $region43: #{tpu_custom_call.1} parent=11 // pred_region
          _
        $region44: #{tpu_custom_call.1} parent=11 // pred_fallthru
          _
      $region12: #{tpu_custom_call.1} parent=5 // pred_fallthru
        _
      %p367 = scmp.lt.s32.totalorder %s28, 4
      // Predicated region
      $region45: #{tpu_custom_call.1} parent=5 // pred_check
        %p368 = pneg %p367
      $region46: #{tpu_custom_call.1} parent=5 // pred_check_branch
        %370 = sbr.rel (%p368) target = $region48
      $region47: #{tpu_custom_call.1} parent=5 // pred_region
        // Predicated region
        $region49: #{tpu_custom_call.1} parent=47 // pred_check
          %p371 = pneg %p48
        $region50: #{tpu_custom_call.1} parent=47 // pred_check_branch
          %373 = sbr.rel (%p371) target = $region52
        $region51: #{tpu_custom_call.1} parent=47 // pred_region
          %s374 = sand.u32 %s38, 1
          %s375 = scalar_lea.sflag [#allocation4], %s374
          %s376 = sand.u32 %s38, 1
          %s377 = smul.addr %s376, 8
          %s378 = scalar_lea.vmem [#allocation3], %s377
          %s380 = ssub.s32 128, 128
          %381 = vsyncadd %s375, %s380
          %s382 = smul.addr %s28, 128
          %s383 = scalar_lea.hbm %s0, %s382
          %s385 = sshll.u32 %s378, 4
          %s386 = int_to_ptr.vmem [resolvable:$true] %s385
          %388 = dma.hbm_to_vmem [thread:$0]  %s383, 128, %s386, %s375
        $region52: #{tpu_custom_call.1} parent=47 // pred_fallthru
          _
        // Predicated region
        $region53: #{tpu_custom_call.1} parent=47 // pred_check
          %p389 = pneg %p74
        $region54: #{tpu_custom_call.1} parent=47 // pred_check_branch
          %391 = sbr.rel (%p389) target = $region56
        $region55: #{tpu_custom_call.1} parent=47 // pred_region
          %s392 = sand.u32 %s28, 1
          %s393 = scalar_lea.sflag [#allocation7], %s392
          %s394 = sand.u32 %s64, 1
          %s395 = smul.addr %s394, 8
          %s396 = scalar_lea.vmem [#allocation6], %s395
          %s398 = ssub.s32 128, 128
          %399 = vsyncadd %s393, %s398
          %s400 = smul.addr %s28, 128
          %s401 = scalar_lea.hbm %s1, %s400
          %s403 = sshll.u32 %s396, 4
          %s404 = int_to_ptr.vmem [resolvable:$true] %s403
          %406 = dma.hbm_to_vmem [thread:$0]  %s401, 128, %s404, %s393
        $region56: #{tpu_custom_call.1} parent=47 // pred_fallthru
          _
        // Predicated region
        $region57: #{tpu_custom_call.1} parent=47 // pred_check
          %p407 = pneg %p100
        $region58: #{tpu_custom_call.1} parent=47 // pred_check_branch
          %409 = sbr.rel (%p407) target = $region60
        $region59: #{tpu_custom_call.1} parent=47 // pred_region
          %s410 = sand.u32 %s28, 1
          %s411 = scalar_lea.sflag [#allocation7], %s410
          %s412 = sand.u32 %s90, 1
          %s413 = smul.addr %s412, 8
          %s414 = scalar_lea.vmem [#allocation8], %s413
          %s416 = ssub.s32 128, 128
          %417 = vsyncadd %s411, %s416
          %s418 = smul.addr %s28, 128
          %s419 = scalar_lea.hbm %s2, %s418
          %s421 = sshll.u32 %s414, 4
          %s422 = int_to_ptr.vmem [resolvable:$true] %s421
          %424 = dma.hbm_to_vmem [thread:$0]  %s419, 128, %s422, %s411
        $region60: #{tpu_custom_call.1} parent=47 // pred_fallthru
          _
      $region48: #{tpu_custom_call.1} parent=5 // pred_fallthru
        _
      %p425 = scmp.le.s32.totalorder 1, %s28
      %p426 = scmp.lt.s32.totalorder %s28, 5
      %p427 = pnand %p425, %p426
      %p428 = pneg %p427
      // Predicated region
      $region61: #{tpu_custom_call.1} parent=5 // pred_check
        _
      $region62: #{tpu_custom_call.1} parent=5 // pred_check_branch
        %430 = sbr.rel (%p427) target = $region64
      $region63: #{tpu_custom_call.1} parent=5 // pred_region
        %s431 = ssub.s32 %s28, 1
        %s432 = sand.u32 %s41, 1
        %s433 = scalar_lea.sflag [#allocation4], %s432
        %s434 = sand.u32 %s41, 1
        %s435 = smul.addr %s434, 8
        %s436 = scalar_lea.vmem [#allocation3], %s435
        // Predicated region
        $region65: #{tpu_custom_call.1} parent=63 // pred_check
          %p437 = pneg %p54
        $region66: #{tpu_custom_call.1} parent=63 // pred_check_branch
          %439 = sbr.rel (%p437) target = $region68
        $region67: #{tpu_custom_call.1} parent=63 // pred_region
          %440 = dma.done %s433, 128
        $region68: #{tpu_custom_call.1} parent=63 // pred_fallthru
          _
        %s441 = sand.u32 %s33, 1
        %s442 = scalar_lea.sflag [#allocation7], %s441
        %s443 = sand.u32 %s67, 1
        %s444 = smul.addr %s443, 8
        %s445 = scalar_lea.vmem [#allocation6], %s444
        // Predicated region
        $region69: #{tpu_custom_call.1} parent=63 // pred_check
          %p446 = pneg %p80
        $region70: #{tpu_custom_call.1} parent=63 // pred_check_branch
          %448 = sbr.rel (%p446) target = $region72
        $region71: #{tpu_custom_call.1} parent=63 // pred_region
          %449 = dma.done %s442, 128
        $region72: #{tpu_custom_call.1} parent=63 // pred_fallthru
          _
        %s450 = sand.u32 %s33, 1
        %s451 = scalar_lea.sflag [#allocation7], %s450
        %s452 = sand.u32 %s93, 1
        %s453 = smul.addr %s452, 8
        %s454 = scalar_lea.vmem [#allocation8], %s453
        // Predicated region
        $region73: #{tpu_custom_call.1} parent=63 // pred_check
          %p455 = pneg %p106
        $region74: #{tpu_custom_call.1} parent=63 // pred_check_branch
          %457 = sbr.rel (%p455) target = $region76
        $region75: #{tpu_custom_call.1} parent=63 // pred_region
          %458 = dma.done %s451, 128
        $region76: #{tpu_custom_call.1} parent=63 // pred_fallthru
          _
        // Predicated region
        $region77: #{tpu_custom_call.1} parent=63 // pred_check
          %p459 = pneg %p127
        $region78: #{tpu_custom_call.1} parent=63 // pred_check_branch
          %461 = sbr.rel (%p459) target = $region80
        $region79: #{tpu_custom_call.1} parent=63 // pred_region
          %462 = dma.done [#allocation10], 256
        $region80: #{tpu_custom_call.1} parent=63 // pred_fallthru
          _
        // Predicated region
        $region81: #{tpu_custom_call.1} parent=63 // pred_check
          %p463 = pneg %p148
        $region82: #{tpu_custom_call.1} parent=63 // pred_check_branch
          %465 = sbr.rel (%p463) target = $region84
        $region83: #{tpu_custom_call.1} parent=63 // pred_region
          %466 = dma.done [#allocation10], 256
        $region84: #{tpu_custom_call.1} parent=63 // pred_fallthru
          _
        // Predicated region
        $region85: #{tpu_custom_call.1} parent=63 // pred_check
          %p467 = pneg %p232
        $region86: #{tpu_custom_call.1} parent=63 // pred_check_branch
          %469 = sbr.rel (%p467) target = $region88
        $region87: #{tpu_custom_call.1} parent=63 // pred_region
          %470 = dma.done [#allocation13], 16
        $region88: #{tpu_custom_call.1} parent=63 // pred_fallthru
          _
        %s471 = sand.u32 %s41, 1
        %s472 = scalar_lea.sflag [#allocation4], %s471
        %s473 = sand.u32 %s41, 1
        %s474 = smul.addr %s473, 8
        %s475 = scalar_lea.vmem [#allocation3], %s474
        %p476 = pneg %p54
        %p477 = pneg %p51
        %s478 = sand.u32 %s33, 1
        %s479 = scalar_lea.sflag [#allocation7], %s478
        %s480 = sand.u32 %s67, 1
        %s481 = smul.addr %s480, 8
        %s482 = scalar_lea.vmem [#allocation6], %s481
        %p483 = pneg %p80
        %p484 = pneg %p77
        %s485 = sand.u32 %s33, 1
        %s486 = scalar_lea.sflag [#allocation7], %s485
        %s487 = sand.u32 %s93, 1
        %s488 = smul.addr %s487, 8
        %s489 = scalar_lea.vmem [#allocation8], %s488
        %p490 = pneg %p106
        %p491 = pneg %p103
        %p492 = pneg %p127
        %p493 = pneg %p124
        %p494 = pneg %p148
        %p495 = pneg %p145
        %p496 = pneg %p169
        %p497 = pneg %p166
        %p498 = pneg %p190
        %p499 = pneg %p187
        %p500 = pneg %p211
        %p501 = pneg %p208
        %p502 = pneg %p232
        %p503 = pneg %p229
        %p504 = pneg %p253
        %p505 = pneg %p250
        %p506 = pneg %p274
        %p507 = pneg %p271
        %p508 = pneg %p300
        %p509 = pneg %p297
        %s510 = sand.u32 %s287, 1
        %s511 = scalar_lea.sflag [#allocation5], %s510
        %s512 = sand.u32 %s287, 1
        %s513 = smul.addr %s512, 8
        %s514 = scalar_lea.vmem [#allocation14], %s513
        %v516 = vld [vmem:[%s436] sm:$0xff]
        %v517 = vpack.c.bf16 %v516, %v516
        %v518 = vld [vmem:[#allocation9] sm:$0xf]
        %v519 = vld [vmem:[#allocation9 + $0x4] sm:$0xf]
        %v520 = vld [vmem:[#allocation9 + $0x8] sm:$0xf]
        %v521 = vld [vmem:[#allocation9 + $0xc] sm:$0xf]
        %v522 = vld [vmem:[%s6] sm:$0x1]
        %v524 = vlaneseq
        %v525 = vshrl.u32 %v524, 7
        %v526 = vsub.s32 0, %v525
        %v527 = vrot.slane %v522, %v526
        %v533 = vunpack.c.l.b16 %v518
        %v534 = vunpack.c.l.b16 %v519
        %v535 = vunpack.c.l.b16 %v520
        %v536 = vunpack.c.l.b16 %v521
        %v537 = vpack.c.b16 %v534, %v533
        %v538 = vpack.c.b16 %v536, %v535
        %vm541 = vcmask 261120
        %v543 = vsel %vm541, %v517, 0
        %545 = vmatprep.subr.bf16.mxu0 0
        %546 = vmatpush1.bf16.msra.mxu0 %v537
        %547 = vmatprep.subr.bf16.mxu0 0
        %548 = vmatpush1.bf16.msra.mxu0 %v538
        %549 = vmatprep.subr.bf16.mxu0 0
        %550 = vmatpush1.bf16.msra.mxu0 0
        %551 = vmatprep.subr.bf16.mxu0 0
        %552 = vmatpush1.bf16.msra.mxu0 0
        %553 = vmatprep.subr.bf16.mxu0 0
        %554 = vmatpush1.bf16.msra.mxu0 0
        %555 = vmatprep.subr.bf16.mxu0 0
        %556 = vmatpush1.bf16.msra.mxu0 0
        %557 = vmatprep.subr.bf16.mxu0 0
        %558 = vmatpush1.bf16.msra.mxu0 0
        %559 = vmatprep.subr.bf16.mxu0 0
        %560 = vmatpush1.bf16.msra.mxu0 0
        %561 = vmatprep.subr.bf16.mxu0 0
        %562 = vmatpush1.bf16.msra.mxu0 0
        %563 = vmatprep.subr.bf16.mxu0 0
        %564 = vmatpush1.bf16.msra.mxu0 0
        %565 = vmatprep.subr.bf16.mxu0 0
        %566 = vmatpush1.bf16.msra.mxu0 0
        %567 = vmatprep.subr.bf16.mxu0 0
        %568 = vmatpush1.bf16.msra.mxu0 0
        %569 = vmatprep.subr.bf16.mxu0 0
        %570 = vmatpush1.bf16.msra.mxu0 0
        %571 = vmatprep.subr.bf16.mxu0 0
        %572 = vmatpush1.bf16.msra.mxu0 0
        %573 = vmatprep.subr.bf16.mxu0 0
        %574 = vmatpush1.bf16.msra.mxu0 0
        %575 = vmatprep.subr.bf16.mxu0 0
        %576 = vmatpush1.bf16.msra.mxu0 0
        %577 = vmatprep.mubr.bf16.mxu0 0
        %578 = vmatmul.mubr.bf16.gmra.mrb[0].mxu0 %v543
        %v579 = vpop.f32.mrb[0].mxu0
        %v580 = vadd.f32 %v527, %v579
        %v581 = vpop.f32.mrb[0].mxu0
        %v582 = vpop.f32.mrb[0].mxu0
        %v583 = vpop.f32.mrb[0].mxu0
        %584 = vdwg.mxu0
        %v585 = vpack.c.bf16 %v580, %v580
        %v586 = vld [vmem:[%s445] sm:$0xff]
        %v587 = vpack.c.bf16 %v586, %v586
        %v588 = vld [vmem:[#allocation11] sm:$0xf]
        %v589 = vld [vmem:[#allocation11 + $0x4] sm:$0xf]
        %v590 = vld [vmem:[#allocation11 + $0x8] sm:$0xf]
        %v591 = vld [vmem:[#allocation11 + $0xc] sm:$0xf]
        %v592 = vld [vmem:[%s7] sm:$0x1]
        %v594 = vlaneseq
        %v595 = vshrl.u32 %v594, 7
        %v596 = vsub.s32 0, %v595
        %v597 = vrot.slane %v592, %v596
        %v603 = vunpack.c.l.b16 %v588
        %v604 = vunpack.c.l.b16 %v589
        %v605 = vunpack.c.l.b16 %v590
        %v606 = vunpack.c.l.b16 %v591
        %v607 = vpack.c.b16 %v604, %v603
        %v608 = vpack.c.b16 %v606, %v605
        %v612 = vsel %vm541, %v587, 0
        %614 = vmatprep.subr.bf16.mxu0 0
        %615 = vmatpush1.bf16.msra.mxu0 %v607
        %616 = vmatprep.subr.bf16.mxu0 0
        %617 = vmatpush1.bf16.msra.mxu0 %v608
        %618 = vmatprep.subr.bf16.mxu0 0
        %619 = vmatpush1.bf16.msra.mxu0 0
        %620 = vmatprep.subr.bf16.mxu0 0
        %621 = vmatpush1.bf16.msra.mxu0 0
        %622 = vmatprep.subr.bf16.mxu0 0
        %623 = vmatpush1.bf16.msra.mxu0 0
        %624 = vmatprep.subr.bf16.mxu0 0
        %625 = vmatpush1.bf16.msra.mxu0 0
        %626 = vmatprep.subr.bf16.mxu0 0
        %627 = vmatpush1.bf16.msra.mxu0 0
        %628 = vmatprep.subr.bf16.mxu0 0
        %629 = vmatpush1.bf16.msra.mxu0 0
        %630 = vmatprep.subr.bf16.mxu0 0
        %631 = vmatpush1.bf16.msra.mxu0 0
        %632 = vmatprep.subr.bf16.mxu0 0
        %633 = vmatpush1.bf16.msra.mxu0 0
        %634 = vmatprep.subr.bf16.mxu0 0
        %635 = vmatpush1.bf16.msra.mxu0 0
        %636 = vmatprep.subr.bf16.mxu0 0
        %637 = vmatpush1.bf16.msra.mxu0 0
        %638 = vmatprep.subr.bf16.mxu0 0
        %639 = vmatpush1.bf16.msra.mxu0 0
        %640 = vmatprep.subr.bf16.mxu0 0
        %641 = vmatpush1.bf16.msra.mxu0 0
        %642 = vmatprep.subr.bf16.mxu0 0
        %643 = vmatpush1.bf16.msra.mxu0 0
        %644 = vmatprep.subr.bf16.mxu0 0
        %645 = vmatpush1.bf16.msra.mxu0 0
        %646 = vmatprep.mubr.bf16.mxu0 0
        %647 = vmatmul.mubr.bf16.gmra.mrb[0].mxu0 %v612
        %v648 = vpop.f32.mrb[0].mxu0
        %v649 = vadd.f32 %v597, %v648
        %v650 = vpop.f32.mrb[0].mxu0
        %v651 = vpop.f32.mrb[0].mxu0
        %v652 = vpop.f32.mrb[0].mxu0
        %653 = vdwg.mxu0
        %v654 = vpack.c.bf16 %v649, %v649
        %v655 = vld [vmem:[%s454] sm:$0xff]
        %v656 = vpack.c.bf16 %v655, %v655
        %v657 = vld [vmem:[%s5] sm:$0xf]
        %v658 = vld [vmem:[%s5 + $0x4] sm:$0xf]
        %v659 = vld [vmem:[%s5 + $0x8] sm:$0xf]
        %v660 = vld [vmem:[%s5 + $0xc] sm:$0xf]
        %v661 = vld [vmem:[#allocation12] sm:$0x1]
        %v663 = vlaneseq
        %v664 = vshrl.u32 %v663, 7
        %v665 = vsub.s32 0, %v664
        %v666 = vrot.slane %v661, %v665
        %v672 = vunpack.c.l.b16 %v657
        %v673 = vunpack.c.l.b16 %v658
        %v674 = vunpack.c.l.b16 %v659
        %v675 = vunpack.c.l.b16 %v660
        %v676 = vpack.c.b16 %v673, %v672
        %v677 = vpack.c.b16 %v675, %v674
        %v681 = vsel %vm541, %v656, 0
        %683 = vmatprep.subr.bf16.mxu0 0
        %684 = vmatpush1.bf16.msra.mxu0 %v676
        %685 = vmatprep.subr.bf16.mxu0 0
        %686 = vmatpush1.bf16.msra.mxu0 %v677
        %687 = vmatprep.subr.bf16.mxu0 0
        %688 = vmatpush1.bf16.msra.mxu0 0
        %689 = vmatprep.subr.bf16.mxu0 0
        %690 = vmatpush1.bf16.msra.mxu0 0
        %691 = vmatprep.subr.bf16.mxu0 0
        %692 = vmatpush1.bf16.msra.mxu0 0
        %693 = vmatprep.subr.bf16.mxu0 0
        %694 = vmatpush1.bf16.msra.mxu0 0
        %695 = vmatprep.subr.bf16.mxu0 0
        %696 = vmatpush1.bf16.msra.mxu0 0
        %697 = vmatprep.subr.bf16.mxu0 0
        %698 = vmatpush1.bf16.msra.mxu0 0
        %699 = vmatprep.subr.bf16.mxu0 0
        %700 = vmatpush1.bf16.msra.mxu0 0
        %701 = vmatprep.subr.bf16.mxu0 0
        %702 = vmatpush1.bf16.msra.mxu0 0
        %703 = vmatprep.subr.bf16.mxu0 0
        %704 = vmatpush1.bf16.msra.mxu0 0
        %705 = vmatprep.subr.bf16.mxu0 0
        %706 = vmatpush1.bf16.msra.mxu0 0
        %707 = vmatprep.subr.bf16.mxu0 0
        %708 = vmatpush1.bf16.msra.mxu0 0
        %709 = vmatprep.subr.bf16.mxu0 0
        %710 = vmatpush1.bf16.msra.mxu0 0
        %711 = vmatprep.subr.bf16.mxu0 0
        %712 = vmatpush1.bf16.msra.mxu0 0
        %713 = vmatprep.subr.bf16.mxu0 0
        %714 = vmatpush1.bf16.msra.mxu0 0
        %715 = vmatprep.mubr.bf16.mxu0 0
        %716 = vmatmul.mubr.bf16.gmra.mrb[0].mxu0 %v681
        %v717 = vpop.f32.mrb[0].mxu0
        %v718 = vadd.f32 %v666, %v717
        %v719 = vpop.f32.mrb[0].mxu0
        %v720 = vpop.f32.mrb[0].mxu0
        %v721 = vpop.f32.mrb[0].mxu0
        %722 = vdwg.mxu0
        %v723 = vpack.c.bf16 %v718, %v718
        %vm724 = vcmask 64512
        %v726 = vsel %vm724, %v585, 0
        %v729 = vsel %vm724, %v654, 0
        %731 = vmatprep.subr.bf16.mxu0 0
        %732 = vmatpush1.bf16.xpose.msra.mxu0 %v729
        %733 = vmatprep.subr.bf16.mxu0 0
        %734 = vmatpush1.bf16.xpose.msra.mxu0 0
        %735 = vmatprep.subr.bf16.mxu0 0
        %736 = vmatpush1.bf16.xpose.msra.mxu0 0
        %737 = vmatprep.subr.bf16.mxu0 0
        %738 = vmatpush1.bf16.xpose.msra.mxu0 0
        %739 = vmatprep.subr.bf16.mxu0 0
        %740 = vmatpush1.bf16.xpose.msra.mxu0 0
        %741 = vmatprep.subr.bf16.mxu0 0
        %742 = vmatpush1.bf16.xpose.msra.mxu0 0
        %743 = vmatprep.subr.bf16.mxu0 0
        %744 = vmatpush1.bf16.xpose.msra.mxu0 0
        %745 = vmatprep.subr.bf16.mxu0 0
        %746 = vmatpush1.bf16.xpose.msra.mxu0 0
        %747 = vmatprep.subr.bf16.mxu0 0
        %748 = vmatpush1.bf16.xpose.msra.mxu0 0
        %749 = vmatprep.subr.bf16.mxu0 0
        %750 = vmatpush1.bf16.xpose.msra.mxu0 0
        %751 = vmatprep.subr.bf16.mxu0 0
        %752 = vmatpush1.bf16.xpose.msra.mxu0 0
        %753 = vmatprep.subr.bf16.mxu0 0
        %754 = vmatpush1.bf16.xpose.msra.mxu0 0
        %755 = vmatprep.subr.bf16.mxu0 0
        %756 = vmatpush1.bf16.xpose.msra.mxu0 0
        %757 = vmatprep.subr.bf16.mxu0 0
        %758 = vmatpush1.bf16.xpose.msra.mxu0 0
        %759 = vmatprep.subr.bf16.mxu0 0
        %760 = vmatpush1.bf16.xpose.msra.mxu0 0
        %761 = vmatprep.subr.bf16.mxu0 0
        %762 = vmatpush1.bf16.xpose.msra.mxu0 0
        %763 = vmatprep.mubr.bf16.mxu0 0
        %764 = vmatmul.mubr.bf16.gmra.mrb[0].mxu0 %v726
        %v765 = vpop.f32.mrb[0].mxu0
        %v766 = vadd.f32 0.0, %v765
        %v767 = vpop.f32.mrb[0].mxu0
        %v768 = vpop.f32.mrb[0].mxu0
        %v769 = vpop.f32.mrb[0].mxu0
        %770 = vdwg.mxu0
        %v771 = vsel %vm724, %v766, -inf
        %772 = vmax.xlane.f32.xlu0 %v771
        %v773 = vpop.xlane.xlu0 %772
        %v774 = vsub.f32 %v766, %v773
        %v775 = vmul.f32 %v774, 1.442695
        %v776 = vpow.pop %v775
        %v777 = vsel %vm724, %v776, 0.0
        %778 = vadd.xlane.f32.xlu0 %v777
        %v779 = vpop.xlane.xlu0 %778
        %v780 = vpack.c.bf16 %v776, %v776
        %v782 = vsel %vm724, %v780, 0
        %vm784 = vcmask 1043456
        %v786 = vsel %vm784, %v723, 0
        %788 = vmatprep.subr.bf16.mxu0 0
        %789 = vmatpush1.bf16.msra.mxu0 %v786
        %790 = vmatprep.subr.bf16.mxu0 0
        %791 = vmatpush1.bf16.msra.mxu0 0
        %792 = vmatprep.subr.bf16.mxu0 0
        %793 = vmatpush1.bf16.msra.mxu0 0
        %794 = vmatprep.subr.bf16.mxu0 0
        %795 = vmatpush1.bf16.msra.mxu0 0
        %796 = vmatprep.subr.bf16.mxu0 0
        %797 = vmatpush1.bf16.msra.mxu0 0
        %798 = vmatprep.subr.bf16.mxu0 0
        %799 = vmatpush1.bf16.msra.mxu0 0
        %800 = vmatprep.subr.bf16.mxu0 0
        %801 = vmatpush1.bf16.msra.mxu0 0
        %802 = vmatprep.subr.bf16.mxu0 0
        %803 = vmatpush1.bf16.msra.mxu0 0
        %804 = vmatprep.subr.bf16.mxu0 0
        %805 = vmatpush1.bf16.msra.mxu0 0
        %806 = vmatprep.subr.bf16.mxu0 0
        %807 = vmatpush1.bf16.msra.mxu0 0
        %808 = vmatprep.subr.bf16.mxu0 0
        %809 = vmatpush1.bf16.msra.mxu0 0
        %810 = vmatprep.subr.bf16.mxu0 0
        %811 = vmatpush1.bf16.msra.mxu0 0
        %812 = vmatprep.subr.bf16.mxu0 0
        %813 = vmatpush1.bf16.msra.mxu0 0
        %814 = vmatprep.subr.bf16.mxu0 0
        %815 = vmatpush1.bf16.msra.mxu0 0
        %816 = vmatprep.subr.bf16.mxu0 0
        %817 = vmatpush1.bf16.msra.mxu0 0
        %818 = vmatprep.subr.bf16.mxu0 0
        %819 = vmatpush1.bf16.msra.mxu0 0
        %820 = vmatprep.mubr.bf16.mxu0 0
        %821 = vmatmul.mubr.bf16.gmra.mrb[0].mxu0 %v782
        %v822 = vpop.f32.mrb[0].mxu0
        %v823 = vadd.f32 0.0, %v822
        %v824 = vpop.f32.mrb[0].mxu0
        %v825 = vpop.f32.mrb[0].mxu0
        %v826 = vpop.f32.mrb[0].mxu0
        %827 = vdwg.mxu0
        %v828 = vrcp.pop %v779
        %v829 = vmul.f32 %v823, %v828
        %830 = vst.msk [vmem:[#allocation2] sm:$0xff] %vm724, %v829
        %832 = vrot.lane.b32.xlu0 %v585, 120
        %v833 = vpop.permute.xlu0 %832
        %835 = vrot.lane.b32.xlu0 %v654, 120
        %v836 = vpop.permute.xlu0 %835
        %v838 = vsel %vm724, %v833, 0
        %v841 = vsel %vm724, %v836, 0
        %843 = vmatprep.subr.bf16.mxu0 0
        %844 = vmatpush1.bf16.xpose.msra.mxu0 %v841
        %845 = vmatprep.subr.bf16.mxu0 0
        %846 = vmatpush1.bf16.xpose.msra.mxu0 0
        %847 = vmatprep.subr.bf16.mxu0 0
        %848 = vmatpush1.bf16.xpose.msra.mxu0 0
        %849 = vmatprep.subr.bf16.mxu0 0
        %850 = vmatpush1.bf16.xpose.msra.mxu0 0
        %851 = vmatprep.subr.bf16.mxu0 0
        %852 = vmatpush1.bf16.xpose.msra.mxu0 0
        %853 = vmatprep.subr.bf16.mxu0 0
        %854 = vmatpush1.bf16.xpose.msra.mxu0 0
        %855 = vmatprep.subr.bf16.mxu0 0
        %856 = vmatpush1.bf16.xpose.msra.mxu0 0
        %857 = vmatprep.subr.bf16.mxu0 0
        %858 = vmatpush1.bf16.xpose.msra.mxu0 0
        %859 = vmatprep.subr.bf16.mxu0 0
        %860 = vmatpush1.bf16.xpose.msra.mxu0 0
        %861 = vmatprep.subr.bf16.mxu0 0
        %862 = vmatpush1.bf16.xpose.msra.mxu0 0
        %863 = vmatprep.subr.bf16.mxu0 0
        %864 = vmatpush1.bf16.xpose.msra.mxu0 0
        %865 = vmatprep.subr.bf16.mxu0 0
        %866 = vmatpush1.bf16.xpose.msra.mxu0 0
        %867 = vmatprep.subr.bf16.mxu0 0
        %868 = vmatpush1.bf16.xpose.msra.mxu0 0
        %869 = vmatprep.subr.bf16.mxu0 0
        %870 = vmatpush1.bf16.xpose.msra.mxu0 0
        %871 = vmatprep.subr.bf16.mxu0 0
        %872 = vmatpush1.bf16.xpose.msra.mxu0 0
        %873 = vmatprep.subr.bf16.mxu0 0
        %874 = vmatpush1.bf16.xpose.msra.mxu0 0
        %875 = vmatprep.mubr.bf16.mxu0 0
        %876 = vmatmul.mubr.bf16.gmra.mrb[0].mxu0 %v838
        %v877 = vpop.f32.mrb[0].mxu0
        %v878 = vadd.f32 0.0, %v877
        %v879 = vpop.f32.mrb[0].mxu0
        %v880 = vpop.f32.mrb[0].mxu0
        %v881 = vpop.f32.mrb[0].mxu0
        %882 = vdwg.mxu0
        %v883 = vsel %vm724, %v878, -inf
        %884 = vmax.xlane.f32.xlu0 %v883
        %v885 = vpop.xlane.xlu0 %884
        %v886 = vsub.f32 %v878, %v885
        %v887 = vmul.f32 %v886, 1.442695
        %v888 = vpow.pop %v887
        %v889 = vsel %vm724, %v888, 0.0
        %890 = vadd.xlane.f32.xlu0 %v889
        %v891 = vpop.xlane.xlu0 %890
        %v892 = vpack.c.bf16 %v888, %v888
        %894 = vrot.lane.b32.xlu0 %v723, 120
        %v895 = vpop.permute.xlu0 %894
        %v897 = vsel %vm724, %v892, 0
        %v900 = vsel %vm784, %v895, 0
        %902 = vmatprep.subr.bf16.mxu0 0
        %903 = vmatpush1.bf16.msra.mxu0 %v900
        %904 = vmatprep.subr.bf16.mxu0 0
        %905 = vmatpush1.bf16.msra.mxu0 0
        %906 = vmatprep.subr.bf16.mxu0 0
        %907 = vmatpush1.bf16.msra.mxu0 0
        %908 = vmatprep.subr.bf16.mxu0 0
        %909 = vmatpush1.bf16.msra.mxu0 0
        %910 = vmatprep.subr.bf16.mxu0 0
        %911 = vmatpush1.bf16.msra.mxu0 0
        %912 = vmatprep.subr.bf16.mxu0 0
        %913 = vmatpush1.bf16.msra.mxu0 0
        %914 = vmatprep.subr.bf16.mxu0 0
        %915 = vmatpush1.bf16.msra.mxu0 0
        %916 = vmatprep.subr.bf16.mxu0 0
        %917 = vmatpush1.bf16.msra.mxu0 0
        %918 = vmatprep.subr.bf16.mxu0 0
        %919 = vmatpush1.bf16.msra.mxu0 0
        %920 = vmatprep.subr.bf16.mxu0 0
        %921 = vmatpush1.bf16.msra.mxu0 0
        %922 = vmatprep.subr.bf16.mxu0 0
        %923 = vmatpush1.bf16.msra.mxu0 0
        %924 = vmatprep.subr.bf16.mxu0 0
        %925 = vmatpush1.bf16.msra.mxu0 0
        %926 = vmatprep.subr.bf16.mxu0 0
        %927 = vmatpush1.bf16.msra.mxu0 0
        %928 = vmatprep.subr.bf16.mxu0 0
        %929 = vmatpush1.bf16.msra.mxu0 0
        %930 = vmatprep.subr.bf16.mxu0 0
        %931 = vmatpush1.bf16.msra.mxu0 0
        %932 = vmatprep.subr.bf16.mxu0 0
        %933 = vmatpush1.bf16.msra.mxu0 0
        %934 = vmatprep.mubr.bf16.mxu0 0
        %935 = vmatmul.mubr.bf16.gmra.mrb[0].mxu0 %v897
        %v936 = vpop.f32.mrb[0].mxu0
        %v937 = vadd.f32 0.0, %v936
        %v938 = vpop.f32.mrb[0].mxu0
        %v939 = vpop.f32.mrb[0].mxu0
        %v940 = vpop.f32.mrb[0].mxu0
        %941 = vdwg.mxu0
        %v942 = vrcp.pop %v891
        %v943 = vmul.f32 %v937, %v942
        %945 = vrot.lane.b32.xlu0 %v943, 8
        %v946 = vpop.permute.xlu0 %945
        %vm948 = vcmask 130112
        %949 = vst.msk [vmem:[#allocation2] sm:$0xff] %vm948, %v946
        %950 = vrot.lane.b32.xlu0 %v585, 112
        %v951 = vpop.permute.xlu0 %950
        %952 = vrot.lane.b32.xlu0 %v654, 112
        %v953 = vpop.permute.xlu0 %952
        %v955 = vsel %vm724, %v951, 0
        %v958 = vsel %vm724, %v953, 0
        %960 = vmatprep.subr.bf16.mxu0 0
        %961 = vmatpush1.bf16.xpose.msra.mxu0 %v958
        %962 = vmatprep.subr.bf16.mxu0 0
        %963 = vmatpush1.bf16.xpose.msra.mxu0 0
        %964 = vmatprep.subr.bf16.mxu0 0
        %965 = vmatpush1.bf16.xpose.msra.mxu0 0
        %966 = vmatprep.subr.bf16.mxu0 0
        %967 = vmatpush1.bf16.xpose.msra.mxu0 0
        %968 = vmatprep.subr.bf16.mxu0 0
        %969 = vmatpush1.bf16.xpose.msra.mxu0 0
        %970 = vmatprep.subr.bf16.mxu0 0
        %971 = vmatpush1.bf16.xpose.msra.mxu0 0
        %972 = vmatprep.subr.bf16.mxu0 0
        %973 = vmatpush1.bf16.xpose.msra.mxu0 0
        %974 = vmatprep.subr.bf16.mxu0 0
        %975 = vmatpush1.bf16.xpose.msra.mxu0 0
        %976 = vmatprep.subr.bf16.mxu0 0
        %977 = vmatpush1.bf16.xpose.msra.mxu0 0
        %978 = vmatprep.subr.bf16.mxu0 0
        %979 = vmatpush1.bf16.xpose.msra.mxu0 0
        %980 = vmatprep.subr.bf16.mxu0 0
        %981 = vmatpush1.bf16.xpose.msra.mxu0 0
        %982 = vmatprep.subr.bf16.mxu0 0
        %983 = vmatpush1.bf16.xpose.msra.mxu0 0
        %984 = vmatprep.subr.bf16.mxu0 0
        %985 = vmatpush1.bf16.xpose.msra.mxu0 0
        %986 = vmatprep.subr.bf16.mxu0 0
        %987 = vmatpush1.bf16.xpose.msra.mxu0 0
        %988 = vmatprep.subr.bf16.mxu0 0
        %989 = vmatpush1.bf16.xpose.msra.mxu0 0
        %990 = vmatprep.subr.bf16.mxu0 0
        %991 = vmatpush1.bf16.xpose.msra.mxu0 0
        %992 = vmatprep.mubr.bf16.mxu0 0
        %993 = vmatmul.mubr.bf16.gmra.mrb[0].mxu0 %v955
        %v994 = vpop.f32.mrb[0].mxu0
        %v995 = vadd.f32 0.0, %v994
        %v996 = vpop.f32.mrb[0].mxu0
        %v997 = vpop.f32.mrb[0].mxu0
        %v998 = vpop.f32.mrb[0].mxu0
        %999 = vdwg.mxu0
        %v1000 = vsel %vm724, %v995, -inf
        %1001 = vmax.xlane.f32.xlu0 %v1000
        %v1002 = vpop.xlane.xlu0 %1001
        %v1003 = vsub.f32 %v995, %v1002
        %v1004 = vmul.f32 %v1003, 1.442695
        %v1005 = vpow.pop %v1004
        %v1006 = vsel %vm724, %v1005, 0.0
        %1007 = vadd.xlane.f32.xlu0 %v1006
        %v1008 = vpop.xlane.xlu0 %1007
        %v1009 = vpack.c.bf16 %v1005, %v1005
        %1010 = vrot.lane.b32.xlu0 %v723, 112
        %v1011 = vpop.permute.xlu0 %1010
        %v1013 = vsel %vm724, %v1009, 0
        %v1016 = vsel %vm784, %v1011, 0
        %1018 = vmatprep.subr.bf16.mxu0 0
        %1019 = vmatpush1.bf16.msra.mxu0 %v1016
        %1020 = vmatprep.subr.bf16.mxu0 0
        %1021 = vmatpush1.bf16.msra.mxu0 0
        %1022 = vmatprep.subr.bf16.mxu0 0
        %1023 = vmatpush1.bf16.msra.mxu0 0
        %1024 = vmatprep.subr.bf16.mxu0 0
        %1025 = vmatpush1.bf16.msra.mxu0 0
        %1026 = vmatprep.subr.bf16.mxu0 0
        %1027 = vmatpush1.bf16.msra.mxu0 0
        %1028 = vmatprep.subr.bf16.mxu0 0
        %1029 = vmatpush1.bf16.msra.mxu0 0
        %1030 = vmatprep.subr.bf16.mxu0 0
        %1031 = vmatpush1.bf16.msra.mxu0 0
        %1032 = vmatprep.subr.bf16.mxu0 0
        %1033 = vmatpush1.bf16.msra.mxu0 0
        %1034 = vmatprep.subr.bf16.mxu0 0
        %1035 = vmatpush1.bf16.msra.mxu0 0
        %1036 = vmatprep.subr.bf16.mxu0 0
        %1037 = vmatpush1.bf16.msra.mxu0 0
        %1038 = vmatprep.subr.bf16.mxu0 0
        %1039 = vmatpush1.bf16.msra.mxu0 0
        %1040 = vmatprep.subr.bf16.mxu0 0
        %1041 = vmatpush1.bf16.msra.mxu0 0
        %1042 = vmatprep.subr.bf16.mxu0 0
        %1043 = vmatpush1.bf16.msra.mxu0 0
        %1044 = vmatprep.subr.bf16.mxu0 0
        %1045 = vmatpush1.bf16.msra.mxu0 0
        %1046 = vmatprep.subr.bf16.mxu0 0
        %1047 = vmatpush1.bf16.msra.mxu0 0
        %1048 = vmatprep.subr.bf16.mxu0 0
        %1049 = vmatpush1.bf16.msra.mxu0 0
        %1050 = vmatprep.mubr.bf16.mxu0 0
        %1051 = vmatmul.mubr.bf16.gmra.mrb[0].mxu0 %v1013
        %v1052 = vpop.f32.mrb[0].mxu0
        %v1053 = vadd.f32 0.0, %v1052
        %v1054 = vpop.f32.mrb[0].mxu0
        %v1055 = vpop.f32.mrb[0].mxu0
        %v1056 = vpop.f32.mrb[0].mxu0
        %1057 = vdwg.mxu0
        %v1058 = vrcp.pop %v1008
        %v1059 = vmul.f32 %v1053, %v1058
        %1061 = vrot.lane.b32.xlu0 %v1059, 16
        %v1062 = vpop.permute.xlu0 %1061
        %vm1064 = vcmask 195712
        %1065 = vst.msk [vmem:[#allocation2] sm:$0xff] %vm1064, %v1062
        %1066 = vrot.lane.b32.xlu0 %v585, 104
        %v1067 = vpop.permute.xlu0 %1066
        %1068 = vrot.lane.b32.xlu0 %v654, 104
        %v1069 = vpop.permute.xlu0 %1068
        %v1071 = vsel %vm724, %v1067, 0
        %v1074 = vsel %vm724, %v1069, 0
        %1076 = vmatprep.subr.bf16.mxu0 0
        %1077 = vmatpush1.bf16.xpose.msra.mxu0 %v1074
        %1078 = vmatprep.subr.bf16.mxu0 0
        %1079 = vmatpush1.bf16.xpose.msra.mxu0 0
        %1080 = vmatprep.subr.bf16.mxu0 0
        %1081 = vmatpush1.bf16.xpose.msra.mxu0 0
        %1082 = vmatprep.subr.bf16.mxu0 0
        %1083 = vmatpush1.bf16.xpose.msra.mxu0 0
        %1084 = vmatprep.subr.bf16.mxu0 0
        %1085 = vmatpush1.bf16.xpose.msra.mxu0 0
        %1086 = vmatprep.subr.bf16.mxu0 0
        %1087 = vmatpush1.bf16.xpose.msra.mxu0 0
        %1088 = vmatprep.subr.bf16.mxu0 0
        %1089 = vmatpush1.bf16.xpose.msra.mxu0 0
        %1090 = vmatprep.subr.bf16.mxu0 0
        %1091 = vmatpush1.bf16.xpose.msra.mxu0 0
        %1092 = vmatprep.subr.bf16.mxu0 0
        %1093 = vmatpush1.bf16.xpose.msra.mxu0 0
        %1094 = vmatprep.subr.bf16.mxu0 0
        %1095 = vmatpush1.bf16.xpose.msra.mxu0 0
        %1096 = vmatprep.subr.bf16.mxu0 0
        %1097 = vmatpush1.bf16.xpose.msra.mxu0 0
        %1098 = vmatprep.subr.bf16.mxu0 0
        %1099 = vmatpush1.bf16.xpose.msra.mxu0 0
        %1100 = vmatprep.subr.bf16.mxu0 0
        %1101 = vmatpush1.bf16.xpose.msra.mxu0 0
        %1102 = vmatprep.subr.bf16.mxu0 0
        %1103 = vmatpush1.bf16.xpose.msra.mxu0 0
        %1104 = vmatprep.subr.bf16.mxu0 0
        %1105 = vmatpush1.bf16.xpose.msra.mxu0 0
        %1106 = vmatprep.subr.bf16.mxu0 0
        %1107 = vmatpush1.bf16.xpose.msra.mxu0 0
        %1108 = vmatprep.mubr.bf16.mxu0 0
        %1109 = vmatmul.mubr.bf16.gmra.mrb[0].mxu0 %v1071
        %v1110 = vpop.f32.mrb[0].mxu0
        %v1111 = vadd.f32 0.0, %v1110
        %v1112 = vpop.f32.mrb[0].mxu0
        %v1113 = vpop.f32.mrb[0].mxu0
        %v1114 = vpop.f32.mrb[0].mxu0
        %1115 = vdwg.mxu0
        %v1116 = vsel %vm724, %v1111, -inf
        %1117 = vmax.xlane.f32.xlu0 %v1116
        %v1118 = vpop.xlane.xlu0 %1117
        %v1119 = vsub.f32 %v1111, %v1118
        %v1120 = vmul.f32 %v1119, 1.442695
        %v1121 = vpow.pop %v1120
        %v1122 = vsel %vm724, %v1121, 0.0
        %1123 = vadd.xlane.f32.xlu0 %v1122
        %v1124 = vpop.xlane.xlu0 %1123
        %v1125 = vpack.c.bf16 %v1121, %v1121
        %1126 = vrot.lane.b32.xlu0 %v723, 104
        %v1127 = vpop.permute.xlu0 %1126
        %v1129 = vsel %vm724, %v1125, 0
        %v1132 = vsel %vm784, %v1127, 0
        %1134 = vmatprep.subr.bf16.mxu0 0
        %1135 = vmatpush1.bf16.msra.mxu0 %v1132
        %1136 = vmatprep.subr.bf16.mxu0 0
        %1137 = vmatpush1.bf16.msra.mxu0 0
        %1138 = vmatprep.subr.bf16.mxu0 0
        %1139 = vmatpush1.bf16.msra.mxu0 0
        %1140 = vmatprep.subr.bf16.mxu0 0
        %1141 = vmatpush1.bf16.msra.mxu0 0
        %1142 = vmatprep.subr.bf16.mxu0 0
        %1143 = vmatpush1.bf16.msra.mxu0 0
        %1144 = vmatprep.subr.bf16.mxu0 0
        %1145 = vmatpush1.bf16.msra.mxu0 0
        %1146 = vmatprep.subr.bf16.mxu0 0
        %1147 = vmatpush1.bf16.msra.mxu0 0
        %1148 = vmatprep.subr.bf16.mxu0 0
        %1149 = vmatpush1.bf16.msra.mxu0 0
        %1150 = vmatprep.subr.bf16.mxu0 0
        %1151 = vmatpush1.bf16.msra.mxu0 0
        %1152 = vmatprep.subr.bf16.mxu0 0
        %1153 = vmatpush1.bf16.msra.mxu0 0
        %1154 = vmatprep.subr.bf16.mxu0 0
        %1155 = vmatpush1.bf16.msra.mxu0 0
        %1156 = vmatprep.subr.bf16.mxu0 0
        %1157 = vmatpush1.bf16.msra.mxu0 0
        %1158 = vmatprep.subr.bf16.mxu0 0
        %1159 = vmatpush1.bf16.msra.mxu0 0
        %1160 = vmatprep.subr.bf16.mxu0 0
        %1161 = vmatpush1.bf16.msra.mxu0 0
        %1162 = vmatprep.subr.bf16.mxu0 0
        %1163 = vmatpush1.bf16.msra.mxu0 0
        %1164 = vmatprep.subr.bf16.mxu0 0
        %1165 = vmatpush1.bf16.msra.mxu0 0
        %1166 = vmatprep.mubr.bf16.mxu0 0
        %1167 = vmatmul.mubr.bf16.gmra.mrb[0].mxu0 %v1129
        %v1168 = vpop.f32.mrb[0].mxu0
        %v1169 = vadd.f32 0.0, %v1168
        %v1170 = vpop.f32.mrb[0].mxu0
        %v1171 = vpop.f32.mrb[0].mxu0
        %v1172 = vpop.f32.mrb[0].mxu0
        %1173 = vdwg.mxu0
        %v1174 = vrcp.pop %v1124
        %v1175 = vmul.f32 %v1169, %v1174
        %1177 = vrot.lane.b32.xlu0 %v1175, 24
        %v1178 = vpop.permute.xlu0 %1177
        %vm1180 = vcmask 261312
        %1181 = vst.msk [vmem:[#allocation2] sm:$0xff] %vm1180, %v1178
        %v1182 = vld [vmem:[#allocation2] sm:$0xff]
        %v1183 = vpack.c.bf16 %v1182, %v1182
        %v1184 = vld [vmem:[%s9] sm:$0xf]
        %v1185 = vld [vmem:[%s9 + $0x4] sm:$0xf]
        %v1186 = vld [vmem:[%s9 + $0x8] sm:$0xf]
        %v1187 = vld [vmem:[%s9 + $0xc] sm:$0xf]
        %v1188 = vld [vmem:[%s10] sm:$0x1]
        %v1190 = vlaneseq
        %v1191 = vshrl.u32 %v1190, 7
        %v1192 = vsub.s32 0, %v1191
        %v1193 = vrot.slane %v1188, %v1192
        %v1199 = vunpack.c.l.b16 %v1184
        %v1200 = vunpack.c.l.b16 %v1185
        %v1201 = vunpack.c.l.b16 %v1186
        %v1202 = vunpack.c.l.b16 %v1187
        %v1203 = vpack.c.b16 %v1200, %v1199
        %v1204 = vpack.c.b16 %v1202, %v1201
        %v1208 = vsel %vm541, %v1183, 0
        %1210 = vmatprep.subr.bf16.mxu0 0
        %1211 = vmatpush1.bf16.msra.mxu0 %v1203
        %1212 = vmatprep.subr.bf16.mxu0 0
        %1213 = vmatpush1.bf16.msra.mxu0 %v1204
        %1214 = vmatprep.subr.bf16.mxu0 0
        %1215 = vmatpush1.bf16.msra.mxu0 0
        %1216 = vmatprep.subr.bf16.mxu0 0
        %1217 = vmatpush1.bf16.msra.mxu0 0
        %1218 = vmatprep.subr.bf16.mxu0 0
        %1219 = vmatpush1.bf16.msra.mxu0 0
        %1220 = vmatprep.subr.bf16.mxu0 0
        %1221 = vmatpush1.bf16.msra.mxu0 0
        %1222 = vmatprep.subr.bf16.mxu0 0
        %1223 = vmatpush1.bf16.msra.mxu0 0
        %1224 = vmatprep.subr.bf16.mxu0 0
        %1225 = vmatpush1.bf16.msra.mxu0 0
        %1226 = vmatprep.subr.bf16.mxu0 0
        %1227 = vmatpush1.bf16.msra.mxu0 0
        %1228 = vmatprep.subr.bf16.mxu0 0
        %1229 = vmatpush1.bf16.msra.mxu0 0
        %1230 = vmatprep.subr.bf16.mxu0 0
        %1231 = vmatpush1.bf16.msra.mxu0 0
        %1232 = vmatprep.subr.bf16.mxu0 0
        %1233 = vmatpush1.bf16.msra.mxu0 0
        %1234 = vmatprep.subr.bf16.mxu0 0
        %1235 = vmatpush1.bf16.msra.mxu0 0
        %1236 = vmatprep.subr.bf16.mxu0 0
        %1237 = vmatpush1.bf16.msra.mxu0 0
        %1238 = vmatprep.subr.bf16.mxu0 0
        %1239 = vmatpush1.bf16.msra.mxu0 0
        %1240 = vmatprep.subr.bf16.mxu0 0
        %1241 = vmatpush1.bf16.msra.mxu0 0
        %1242 = vmatprep.mubr.bf16.mxu0 0
        %1243 = vmatmul.mubr.bf16.gmra.mrb[0].mxu0 %v1208
        %v1244 = vpop.f32.mrb[0].mxu0
        %v1245 = vadd.f32 %v1193, %v1244
        %v1246 = vpop.f32.mrb[0].mxu0
        %v1247 = vpop.f32.mrb[0].mxu0
        %v1248 = vpop.f32.mrb[0].mxu0
        %1249 = vdwg.mxu0
        %1250 = vst.msk [vmem:[%s514] sm:$0xff] %vm541, %v1245
        %s1251 = sand.u32 %s287, 1
        %s1252 = scalar_lea.sflag [#allocation5], %s1251
        %s1253 = sand.u32 %s287, 1
        %s1254 = smul.addr %s1253, 8
        %s1255 = scalar_lea.vmem [#allocation14], %s1254
        // Predicated region
        $region89: #{tpu_custom_call.1} parent=63 // pred_check
          %p1256 = pneg %p297
        $region90: #{tpu_custom_call.1} parent=63 // pred_check_branch
          %1258 = sbr.rel (%p1256) target = $region92
        $region91: #{tpu_custom_call.1} parent=63 // pred_region
          %s1260 = ssub.s32 128, 128
          %1261 = vsyncadd %s1252, %s1260
          %s1262 = smul.addr %s33, 128
          %s1263 = scalar_lea.hbm %s11, %s1262
          %s1265 = sshll.u32 %s1255, 4
          %s1266 = int_to_ptr.vmem [resolvable:$true] %s1265
          %1268 = dma.vmem_to_hbm [thread:$0]  %s1266, 128, %s1263, %s1252
        $region92: #{tpu_custom_call.1} parent=63 // pred_fallthru
          _
      $region64: #{tpu_custom_call.1} parent=5 // pred_fallthru
        _
      %p1269 = scmp.le.s32.totalorder 2, %s28
      // Predicated region
      $region93: #{tpu_custom_call.1} parent=5 // pred_check
        %p1270 = pneg %p1269
      $region94: #{tpu_custom_call.1} parent=5 // pred_check_branch
        %1272 = sbr.rel (%p1270) target = $region96
      $region95: #{tpu_custom_call.1} parent=5 // pred_region
        %s1273 = ssub.s32 %s28, 2
        // Predicated region
        $region97: #{tpu_custom_call.1} parent=95 // pred_check
          %p1274 = pneg %p303
        $region98: #{tpu_custom_call.1} parent=95 // pred_check_branch
          %1276 = sbr.rel (%p1274) target = $region100
        $region99: #{tpu_custom_call.1} parent=95 // pred_region
          %s1277 = sand.u32 %s288, 1
          %s1278 = scalar_lea.sflag [#allocation5], %s1277
          %s1279 = sand.u32 %s288, 1
          %s1280 = smul.addr %s1279, 8
          %s1281 = scalar_lea.vmem [#allocation14], %s1280
          %1282 = dma.done %s1278, 128
        $region100: #{tpu_custom_call.1} parent=95 // pred_fallthru
          _
      $region96: #{tpu_custom_call.1} parent=5 // pred_fallthru
        _
    $region6: #{tpu_custom_call.1} parent=1 // loop_footer
      %s32 = sadd.s32 1, %s28
    $region7: #{tpu_custom_call.1} parent=1 // loop_footer_branch
      %27 = sbr.rel target = $region3
    $region8: #{tpu_custom_call.1} parent=1 // loop_exit
      _
    %1283 = vsyncpa [#allocation4], 1
    %s1284 = scalar_lea.sflag [#allocation4], 1
    %1285 = vsyncpa %s1284, 1
    %1286 = vsyncpa [#allocation7], 1
    %s1287 = scalar_lea.sflag [#allocation7], 1
    %1288 = vsyncpa %s1287, 1
    %1289 = vsyncpa [#allocation10], 1
    %1290 = vsyncpa [#allocation13], 1
    %1291 = vsyncpa [#allocation5], 1
    %s1292 = scalar_lea.sflag [#allocation5], 1
    %1293 = vsyncpa %s1292, 1

</llo_original>
